<compile_context>
chip_gen: v7x
topology: tpu7x:2x2x1
jax: 0.10.0
libtpu: 0.0.40
codegen_flags: <defaults>
</compile_context>

<pallas_src>
import functools

import jax
import jax.numpy as jnp
from jax.experimental import pallas as pl
from jax.experimental.pallas import tpu as pltpu


_INV_SQRT2 = 0.7071067811865476


def _gelu_exact(x):
    # PyTorch nn.GELU() default: 0.5 * x * (1 + erf(x / sqrt(2)))
    return 0.5 * x * (1.0 + jax.lax.erf(x * _INV_SQRT2))


def _layernorm(x, gamma, beta, eps=1e-5):
    # x: (M, D); gamma/beta: (1, D).  Always f32.
    mu = jnp.mean(x, axis=-1, keepdims=True)
    xc = x - mu
    var = jnp.mean(xc * xc, axis=-1, keepdims=True)
    inv = jax.lax.rsqrt(var + eps)
    return xc * inv * gamma + beta


def encoder_block_kernel(
    x_ref,        # (block_b, N, D)  f32
    gamma_ref,    # (1, D)   shared LayerNorm gamma (f32)
    beta_ref,     # (1, D)   shared LayerNorm beta  (f32)
    wqkv_ref,     # (D, 3D)  qkv weight (no bias), matmul dtype
    wproj_ref,    # (D, D)   matmul dtype
    bproj_ref,    # (1, D)   f32
    w1_ref,       # (D, H)   matmul dtype
    b1_ref,       # (1, H)   f32
    w2_ref,       # (H, D)   matmul dtype
    b2_ref,       # (1, D)   f32
    o_ref,        # (block_b, N, D)
    *,
    num_heads,
    matmul_dtype,
):
    block_b, N, D = x_ref.shape
    M = block_b * N
    head_dim = D // num_heads
    scale = float(head_dim) ** -0.5

    # Cast only matmul *activation operands*; weights already arrive in matmul
    # dtype; accumulation stays f32 via preferred_element_type.
    if matmul_dtype is None:
        cast = lambda t: t
    else:
        cast = lambda t: t.astype(matmul_dtype)

    # Flatten (batch-block, seq) -> rows so every big matmul sees M = block_b*N.
    x = x_ref[...].reshape(M, D)                       # (M, D) f32
    gamma = gamma_ref[...]                             # loaded once, used twice
    beta = beta_ref[...]

    # ---------------- attention branch ----------------
    xn = _layernorm(x, gamma, beta)                    # (M, D) f32
    qkv = jnp.dot(cast(xn), wqkv_ref[...],
                  preferred_element_type=jnp.float32)  # (M, 3D) f32 accum
    q = qkv[:, 0 * D:1 * D] * scale                    # fold 1/sqrt(hd) into q
    k = qkv[:, 1 * D:2 * D]
    v = qkv[:, 2 * D:3 * D]

    head_outs = []
    for h in range(num_heads):                         # static, short loop over heads
        lo = h * head_dim
        qh = cast(q[:, lo:lo + head_dim].reshape(block_b, N, head_dim))
        kh = cast(k[:, lo:lo + head_dim].reshape(block_b, N, head_dim))
        vh = cast(v[:, lo:lo + head_dim].reshape(block_b, N, head_dim))
        # Scores without materializing k^T; batched over the batch block.
        s = jnp.einsum('bqd,bkd->bqk', qh, kh,
                       preferred_element_type=jnp.float32)      # (b, N, N) f32
        s = s - jnp.max(s, axis=-1, keepdims=True)
        p = jnp.exp(s)
        denom = jnp.sum(p, axis=-1, keepdims=True)
        if matmul_dtype is None:
            p = p / denom                              # exact path: exact divide
        else:
            p = p * pl.reciprocal(denom, approx=True)  # EUP slot, ~free
        oh = jnp.einsum('bqk,bkd->bqd', cast(p), vh,
                        preferred_element_type=jnp.float32)      # (b, N, hd)
        head_outs.append(oh.reshape(M, head_dim))
    attn = jnp.concatenate(head_outs, axis=-1)         # (M, D), heads in head order

    proj = jnp.dot(cast(attn), wproj_ref[...],
                   preferred_element_type=jnp.float32) + bproj_ref[...]
    x1 = x + proj                                      # residual 1 (f32)

    # ---------------- MLP branch (same LayerNorm params, as in PyTorch) ----------
    xn2 = _layernorm(x1, gamma, beta)
    h1 = jnp.dot(cast(xn2), w1_ref[...],
                 preferred_element_type=jnp.float32) + b1_ref[...]
    h1 = _gelu_exact(h1)
    h2 = jnp.dot(cast(h1), w2_ref[...],
                 preferred_element_type=jnp.float32) + b2_ref[...]
    h2 = _gelu_exact(h2)                               # reference MLP: GELU after fc2 too

    o_ref[...] = (x1 + h2).reshape(block_b, N, D).astype(o_ref.dtype)


def _physical_vmem_bytes():
    """Per-TensorCore physical VMEM; conservative fallback (v7x = 64 MiB)."""
    try:
        return int(pltpu.get_tpu_info().vmem_capacity_bytes)
    except Exception:
        return 64 * 2 ** 20


def _choose_block_b(B, N, target_rows=512, min_grid=2):
    """Largest divisor of B s.t. block_b*N <= max(target_rows, N) AND the grid
    (B // block_b) stays >= min_grid (preferring an even grid) so the 'parallel'
    batch axis can shard across both v7x TensorCores."""
    limit = max(target_rows, N)
    divisors = [d for d in range(1, B + 1) if B % d == 0 and d * N <= limit]
    if not divisors:
        divisors = [1]
    for need_even in (True, False):
        good = []
        for d in divisors:
            g = B // d
            if g < min_grid:
                continue
            if need_even and g % 2 != 0:
                continue
            good.append(d)
        if good:
            return max(good)
    return max(divisors)


def encoder_block(x, params, *, num_heads, block_b=None,
                  matmul_dtype=jnp.bfloat16, vmem_limit_bytes=None,
                  interpret=False):
    """ViT encoder block forward.

    x: (B, N, D) float32.  params: dict of f32 weights (see init_params).
    matmul_dtype: jnp.bfloat16 (default, MXU-native on v5e/v6e/v7x; f32 accumulation
      kept) or None for exact f32 matmuls.
    """
    B, N, D = x.shape
    H = params["w1"].shape[1]
    assert D % num_heads == 0

    if block_b is None:
        block_b = _choose_block_b(B, N)
    assert B % block_b == 0
    grid = (B // block_b,)

    # Cast the big matmul weights ONCE here (not per grid step inside the kernel):
    # halves resident weight VMEM + weight DMA.  LN params and biases stay f32.
    wcast = (lambda w: w) if matmul_dtype is None else (lambda w: w.astype(matmul_dtype))
    gamma, beta = params["ln_gamma"], params["ln_beta"]
    wqkv, wproj, bproj = wcast(params["wqkv"]), wcast(params["wproj"]), params["bproj"]
    w1, b1 = wcast(params["w1"]), params["b1"]
    w2, b2 = wcast(params["w2"]), params["b2"]

    if vmem_limit_bytes is None:
        m = block_b * N
        # Single-buffered weights (pl.Buffered(1)) + double-buffered x/out blocks
        # + peak f32 activations (only one head's (b,N,N) scores live at a time)
        # + bf16 operand copies on the bf16 path.  Cap at ~85% of physical VMEM.
        w_bytes = sum(int(a.size) * a.dtype.itemsize
                      for a in (gamma, beta, wqkv, wproj, bproj, w1, b1, w2, b2))
        io_bytes = 2 * 2 * block_b * N * D * x.dtype.itemsize
        act_bytes = 4 * (m * (6 * D + 2 * H) + block_b * N * N)
        if matmul_dtype is not None:
            act_bytes += 2 * m * (3 * D + 2 * H)
        cap = int(0.85 * _physical_vmem_bytes())
        vmem_limit_bytes = min(cap, max(32 * 2 ** 20,
                                        int(1.2 * (w_bytes + io_bytes + act_bytes))))

    kernel = functools.partial(encoder_block_kernel,
                               num_heads=num_heads, matmul_dtype=matmul_dtype)

    def resident(shape):
        # Constant index_map + single buffer: weights/biases are fetched once and
        # stay resident across all grid steps (no pointless double-buffering).
        nd = len(shape)
        return pl.BlockSpec(shape, lambda b, _n=nd: (0,) * _n,
                            pipeline_mode=pl.Buffered(1))

    return pl.pallas_call(
        kernel,
        out_shape=jax.ShapeDtypeStruct((B, N, D), x.dtype),
        grid_spec=pltpu.PrefetchScalarGridSpec(
            num_scalar_prefetch=0,
            grid=grid,
            in_specs=[
                pl.BlockSpec((block_b, N, D), lambda b: (b, 0, 0)),   # x (streamed)
                resident((1, D)),           # ln gamma (shared by both LN sites)
                resident((1, D)),           # ln beta
                resident((D, 3 * D)),       # qkv weight (no bias)
                resident((D, D)),           # proj weight
                resident((1, D)),           # proj bias
                resident((D, H)),           # fc1 weight
                resident((1, H)),           # fc1 bias
                resident((H, D)),           # fc2 weight
                resident((1, D)),           # fc2 bias
            ],
            out_specs=pl.BlockSpec((block_b, N, D), lambda b: (b, 0, 0)),
        ),
        compiler_params=pltpu.CompilerParams(
            dimension_semantics=("parallel",),        # batch-block axis -> megacore
            vmem_limit_bytes=vmem_limit_bytes,
        ),
        interpret=interpret,
    )(x, gamma, beta, wqkv, wproj, bproj, w1, b1, w2, b2)


def init_params(key, dim, num_heads, mlp_ratio=4, dtype=jnp.float32):
    hidden = int(dim * mlp_ratio)
    keys = jax.random.split(key, 8)
    s = 0.02
    return {
        # Single LayerNorm (shared between the two uses, as in the PyTorch module)
        "ln_gamma": jnp.ones((1, dim), dtype),
        "ln_beta": jnp.zeros((1, dim), dtype),
        # attention: qkv (no bias), proj (with bias)
        "wqkv": (s * jax.random.normal(keys[0], (dim, 3 * dim))).astype(dtype),
        "wproj": (s * jax.random.normal(keys[1], (dim, dim))).astype(dtype),
        "bproj": (s * jax.random.normal(keys[2], (1, dim))).astype(dtype),
        # MLP
        "w1": (s * jax.random.normal(keys[3], (dim, hidden))).astype(dtype),
        "b1": (s * jax.random.normal(keys[4], (1, hidden))).astype(dtype),
        "w2": (s * jax.random.normal(keys[5], (hidden, dim))).astype(dtype),
        "b2": (s * jax.random.normal(keys[6], (1, dim))).astype(dtype),
    }


def encoder_block_reference(x, params, *, num_heads):
    """Plain-JAX f32 reference mirroring the PyTorch module (for validation)."""
    B, N, D = x.shape
    hd = D // num_heads
    g, b_ = params["ln_gamma"][0], params["ln_beta"][0]

    def ln(t):
        mu = t.mean(-1, keepdims=True)
        var = ((t - mu) ** 2).mean(-1, keepdims=True)
        return (t - mu) / jnp.sqrt(var + 1e-5) * g + b_

    xn = ln(x)
    qkv = xn @ params["wqkv"]
    qkv = qkv.reshape(B, N, 3, num_heads, hd).transpose(2, 0, 3, 1, 4)
    q, k, v = qkv[0], qkv[1], qkv[2]
    att = jnp.einsum('bhqd,bhkd->bhqk', q, k) * (hd ** -0.5)
    att = jax.nn.softmax(att, axis=-1)
    o = jnp.einsum('bhqk,bhkd->bhqd', att, v)
    o = o.transpose(0, 2, 1, 3).reshape(B, N, D)
    o = o @ params["wproj"] + params["bproj"][0]
    x1 = x + o
    xn2 = ln(x1)
    h = jax.nn.gelu(xn2 @ params["w1"] + params["b1"][0], approximate=False)
    h = jax.nn.gelu(h @ params["w2"] + params["b2"][0], approximate=False)
    return x1 + h


if __name__ == "__main__":
    B, N, D = 2, 8, 32          # batch, num_patches (seq), embedding dim
    num_heads = 4               # head_dim = 8

    key = jax.random.PRNGKey(0)
    kx, kp = jax.random.split(key)
    x = jax.random.normal(kx, (B, N, D), jnp.float32)
    params = init_params(kp, D, num_heads, mlp_ratio=4)

    # Default path: bf16 matmul operands (MXU-native on v5e/v6e/v7x), f32 accumulation,
    # f32 LayerNorm/softmax/GELU/residuals.  Pass matmul_dtype=None for exact f32.
    out = encoder_block(x, params, num_heads=num_heads)
    jax.block_until_ready(out)
    assert out.shape == (B, N, D)

    ref = encoder_block_reference(x, params, num_heads=num_heads)
    max_err = float(jnp.max(jnp.abs(out - ref)))
    assert max_err < 1e-2, f"mismatch vs reference: {max_err}"

    print("KERNEL_OK")
</pallas_src>

<mosaic_0001>
module attributes {stable_mosaic.version = 11 : i64} {
  func.func @encoder_block_kernel(%arg0: i32, %arg1: memref<1x8x32xf32, #tpu.memory_space<vmem>>, %arg2: memref<1x32xf32, #tpu.memory_space<vmem>>, %arg3: memref<1x32xf32, #tpu.memory_space<vmem>>, %arg4: memref<32x96xbf16, #tpu.memory_space<vmem>>, %arg5: memref<32x32xbf16, #tpu.memory_space<vmem>>, %arg6: memref<1x32xf32, #tpu.memory_space<vmem>>, %arg7: memref<32x128xbf16, #tpu.memory_space<vmem>>, %arg8: memref<1x128xf32, #tpu.memory_space<vmem>>, %arg9: memref<128x32xbf16, #tpu.memory_space<vmem>>, %arg10: memref<1x32xf32, #tpu.memory_space<vmem>>, %arg11: memref<1x8x32xf32, #tpu.memory_space<vmem>>) attributes {dimension_semantics = [#tpu.dimension_semantics<parallel>], iteration_bounds = array<i64: 2>, scalar_prefetch = 0 : i64, scratch_operands = 0 : i64, tpu.core_type = #tpu.core_type<tc>, window_params = [{transform_indices = @transform_0, window_bounds = array<i64: 1, 8, 32>}, {pipeline_mode = #tpu.pipeline_mode<synchronous>, transform_indices = @transform_1, window_bounds = array<i64: 1, 32>}, {pipeline_mode = #tpu.pipeline_mode<synchronous>, transform_indices = @transform_2, window_bounds = array<i64: 1, 32>}, {pipeline_mode = #tpu.pipeline_mode<synchronous>, transform_indices = @transform_3, window_bounds = array<i64: 32, 96>}, {pipeline_mode = #tpu.pipeline_mode<synchronous>, transform_indices = @transform_4, window_bounds = array<i64: 32, 32>}, {pipeline_mode = #tpu.pipeline_mode<synchronous>, transform_indices = @transform_5, window_bounds = array<i64: 1, 32>}, {pipeline_mode = #tpu.pipeline_mode<synchronous>, transform_indices = @transform_6, window_bounds = array<i64: 32, 128>}, {pipeline_mode = #tpu.pipeline_mode<synchronous>, transform_indices = @transform_7, window_bounds = array<i64: 1, 128>}, {pipeline_mode = #tpu.pipeline_mode<synchronous>, transform_indices = @transform_8, window_bounds = array<i64: 128, 32>}, {pipeline_mode = #tpu.pipeline_mode<synchronous>, transform_indices = @transform_9, window_bounds = array<i64: 1, 32>}, {transform_indices = @transform_10, window_bounds = array<i64: 1, 8, 32>}]} {
    %c0 = arith.constant 0 : index
    %c0_0 = arith.constant 0 : index
    %c0_1 = arith.constant 0 : index
    %0 = vector.load %arg1[%c0, %c0_0, %c0_1] : memref<1x8x32xf32, #tpu.memory_space<vmem>>, vector<1x8x32xf32>
    %1 = vector.shape_cast %0 : vector<1x8x32xf32> to vector<8x32xf32>
    %c0_2 = arith.constant 0 : index
    %c0_3 = arith.constant 0 : index
    %2 = vector.load %arg2[%c0_2, %c0_3] : memref<1x32xf32, #tpu.memory_space<vmem>>, vector<1x32xf32>
    %c0_4 = arith.constant 0 : index
    %c0_5 = arith.constant 0 : index
    %3 = vector.load %arg3[%c0_4, %c0_5] : memref<1x32xf32, #tpu.memory_space<vmem>>, vector<1x32xf32>
    %cst = arith.constant dense<0.000000e+00> : vector<8xf32>
    %4 = vector.multi_reduction <add>, %1, %cst [1] : vector<8x32xf32> to vector<8xf32>
    %5 = vector.shape_cast %4 : vector<8xf32> to vector<8x1xf32>
    %cst_6 = arith.constant 3.200000e+01 : f32
    %6 = vector.broadcast %cst_6 : f32 to vector<8x1xf32>
    %7 = arith.divf %5, %6 : vector<8x1xf32>
    %8 = vector.broadcast %7 : vector<8x1xf32> to vector<8x32xf32>
    %9 = arith.subf %1, %8 : vector<8x32xf32>
    %10 = arith.mulf %9, %9 : vector<8x32xf32>
    %cst_7 = arith.constant dense<0.000000e+00> : vector<8xf32>
    %11 = vector.multi_reduction <add>, %10, %cst_7 [1] : vector<8x32xf32> to vector<8xf32>
    %12 = vector.shape_cast %11 : vector<8xf32> to vector<8x1xf32>
    %cst_8 = arith.constant 3.200000e+01 : f32
    %13 = vector.broadcast %cst_8 : f32 to vector<8x1xf32>
    %14 = arith.divf %12, %13 : vector<8x1xf32>
    %cst_9 = arith.constant 9.99999974E-6 : f32
    %15 = vector.broadcast %cst_9 : f32 to vector<8x1xf32>
    %16 = arith.addf %14, %15 : vector<8x1xf32>
    %17 = math.rsqrt %16 : vector<8x1xf32>
    %18 = vector.broadcast %17 : vector<8x1xf32> to vector<8x32xf32>
    %19 = arith.mulf %9, %18 : vector<8x32xf32>
    %20 = vector.broadcast %2 : vector<1x32xf32> to vector<8x32xf32>
    %21 = arith.mulf %19, %20 : vector<8x32xf32>
    %22 = vector.broadcast %3 : vector<1x32xf32> to vector<8x32xf32>
    %23 = arith.addf %21, %22 : vector<8x32xf32>
    %24 = arith.truncf %23 : vector<8x32xf32> to vector<8x32xbf16>
    %c0_10 = arith.constant 0 : index
    %c0_11 = arith.constant 0 : index
    %25 = vector.load %arg4[%c0_10, %c0_11] : memref<32x96xbf16, #tpu.memory_space<vmem>>, vector<32x96xbf16>
    %cst_12 = arith.constant dense<0.000000e+00> : vector<8x96xf32>
    %26 = tpu.matmul %24, %25, %cst_12 {dimension_numbers = #tpu.dot_dimension_numbers<[1], [0], [0], [1], [0, 0, 1, 1], [], []>} : vector<8x32xbf16>, vector<32x96xbf16>, vector<8x96xf32> -> vector<8x96xf32>
    %27 = vector.extract_strided_slice %26 {offsets = [0, 0], sizes = [8, 32], strides = [1, 1]} : vector<8x96xf32> to vector<8x32xf32>
    %cst_13 = arith.constant 0.353553385 : f32
    %28 = vector.broadcast %cst_13 : f32 to vector<8x32xf32>
    %29 = arith.mulf %27, %28 : vector<8x32xf32>
    %30 = vector.extract_strided_slice %26 {offsets = [0, 32], sizes = [8, 32], strides = [1, 1]} : vector<8x96xf32> to vector<8x32xf32>
    %31 = vector.extract_strided_slice %26 {offsets = [0, 64], sizes = [8, 32], strides = [1, 1]} : vector<8x96xf32> to vector<8x32xf32>
    %32 = vector.extract_strided_slice %29 {offsets = [0, 0], sizes = [8, 8], strides = [1, 1]} : vector<8x32xf32> to vector<8x8xf32>
    %33 = vector.shape_cast %32 : vector<8x8xf32> to vector<1x8x8xf32>
    %34 = arith.truncf %33 : vector<1x8x8xf32> to vector<1x8x8xbf16>
    %35 = vector.extract_strided_slice %30 {offsets = [0, 0], sizes = [8, 8], strides = [1, 1]} : vector<8x32xf32> to vector<8x8xf32>
    %36 = vector.shape_cast %35 : vector<8x8xf32> to vector<1x8x8xf32>
    %37 = arith.truncf %36 : vector<1x8x8xf32> to vector<1x8x8xbf16>
    %38 = vector.extract_strided_slice %31 {offsets = [0, 0], sizes = [8, 8], strides = [1, 1]} : vector<8x32xf32> to vector<8x8xf32>
    %39 = vector.shape_cast %38 : vector<8x8xf32> to vector<1x8x8xf32>
    %40 = arith.truncf %39 : vector<1x8x8xf32> to vector<1x8x8xbf16>
    "tpu.trace_start"() <{level = 10 : i32, message = "bqd,bkd->bqk"}> : () -> ()
    %cst_14 = arith.constant dense<0.000000e+00> : vector<1x8x8xf32>
    %41 = tpu.matmul %34, %37, %cst_14 {dimension_numbers = #tpu.dot_dimension_numbers<[2], [2], [1], [1], [0, 0, 0, 1, 1, 1], [0], [0]>} : vector<1x8x8xbf16>, vector<1x8x8xbf16>, vector<1x8x8xf32> -> vector<1x8x8xf32>
    "tpu.trace_stop"() : () -> ()
    %cst_15 = arith.constant dense<0xFF800000> : vector<1x8xf32>
    %42 = vector.multi_reduction <maximumf>, %41, %cst_15 [2] : vector<1x8x8xf32> to vector<1x8xf32>
    %43 = vector.shape_cast %42 : vector<1x8xf32> to vector<1x8x1xf32>
    %44 = vector.broadcast %43 : vector<1x8x1xf32> to vector<1x8x8xf32>
    %45 = arith.subf %41, %44 : vector<1x8x8xf32>
    %46 = math.exp %45 : vector<1x8x8xf32>
    %cst_16 = arith.constant dense<0.000000e+00> : vector<1x8xf32>
    %47 = vector.multi_reduction <add>, %46, %cst_16 [2] : vector<1x8x8xf32> to vector<1x8xf32>
    %48 = vector.shape_cast %47 : vector<1x8xf32> to vector<1x8x1xf32>
    %49 = tpu.reciprocal %48 {approx = true} : vector<1x8x1xf32> -> vector<1x8x1xf32>
    %50 = vector.broadcast %49 : vector<1x8x1xf32> to vector<1x8x8xf32>
    %51 = arith.mulf %46, %50 : vector<1x8x8xf32>
    %52 = arith.truncf %51 : vector<1x8x8xf32> to vector<1x8x8xbf16>
    "tpu.trace_start"() <{level = 10 : i32, message = "bqk,bkd->bqd"}> : () -> ()
    %cst_17 = arith.constant dense<0.000000e+00> : vector<1x8x8xf32>
    %53 = tpu.matmul %52, %40, %cst_17 {dimension_numbers = #tpu.dot_dimension_numbers<[2], [1], [1], [2], [0, 0, 0, 1, 1, 2], [0], [0]>} : vector<1x8x8xbf16>, vector<1x8x8xbf16>, vector<1x8x8xf32> -> vector<1x8x8xf32>
    "tpu.trace_stop"() : () -> ()
    %54 = vector.shape_cast %53 : vector<1x8x8xf32> to vector<8x8xf32>
    %55 = vector.extract_strided_slice %29 {offsets = [0, 8], sizes = [8, 8], strides = [1, 1]} : vector<8x32xf32> to vector<8x8xf32>
    %56 = vector.shape_cast %55 : vector<8x8xf32> to vector<1x8x8xf32>
    %57 = arith.truncf %56 : vector<1x8x8xf32> to vector<1x8x8xbf16>
    %58 = vector.extract_strided_slice %30 {offsets = [0, 8], sizes = [8, 8], strides = [1, 1]} : vector<8x32xf32> to vector<8x8xf32>
    %59 = vector.shape_cast %58 : vector<8x8xf32> to vector<1x8x8xf32>
    %60 = arith.truncf %59 : vector<1x8x8xf32> to vector<1x8x8xbf16>
    %61 = vector.extract_strided_slice %31 {offsets = [0, 8], sizes = [8, 8], strides = [1, 1]} : vector<8x32xf32> to vector<8x8xf32>
    %62 = vector.shape_cast %61 : vector<8x8xf32> to vector<1x8x8xf32>
    %63 = arith.truncf %62 : vector<1x8x8xf32> to vector<1x8x8xbf16>
    "tpu.trace_start"() <{level = 10 : i32, message = "bqd,bkd->bqk"}> : () -> ()
    %cst_18 = arith.constant dense<0.000000e+00> : vector<1x8x8xf32>
    %64 = tpu.matmul %57, %60, %cst_18 {dimension_numbers = #tpu.dot_dimension_numbers<[2], [2], [1], [1], [0, 0, 0, 1, 1, 1], [0], [0]>} : vector<1x8x8xbf16>, vector<1x8x8xbf16>, vector<1x8x8xf32> -> vector<1x8x8xf32>
    "tpu.trace_stop"() : () -> ()
    %cst_19 = arith.constant dense<0xFF800000> : vector<1x8xf32>
    %65 = vector.multi_reduction <maximumf>, %64, %cst_19 [2] : vector<1x8x8xf32> to vector<1x8xf32>
    %66 = vector.shape_cast %65 : vector<1x8xf32> to vector<1x8x1xf32>
    %67 = vector.broadcast %66 : vector<1x8x1xf32> to vector<1x8x8xf32>
    %68 = arith.subf %64, %67 : vector<1x8x8xf32>
    %69 = math.exp %68 : vector<1x8x8xf32>
    %cst_20 = arith.constant dense<0.000000e+00> : vector<1x8xf32>
    %70 = vector.multi_reduction <add>, %69, %cst_20 [2] : vector<1x8x8xf32> to vector<1x8xf32>
    %71 = vector.shape_cast %70 : vector<1x8xf32> to vector<1x8x1xf32>
    %72 = tpu.reciprocal %71 {approx = true} : vector<1x8x1xf32> -> vector<1x8x1xf32>
    %73 = vector.broadcast %72 : vector<1x8x1xf32> to vector<1x8x8xf32>
    %74 = arith.mulf %69, %73 : vector<1x8x8xf32>
    %75 = arith.truncf %74 : vector<1x8x8xf32> to vector<1x8x8xbf16>
    "tpu.trace_start"() <{level = 10 : i32, message = "bqk,bkd->bqd"}> : () -> ()
    %cst_21 = arith.constant dense<0.000000e+00> : vector<1x8x8xf32>
    %76 = tpu.matmul %75, %63, %cst_21 {dimension_numbers = #tpu.dot_dimension_numbers<[2], [1], [1], [2], [0, 0, 0, 1, 1, 2], [0], [0]>} : vector<1x8x8xbf16>, vector<1x8x8xbf16>, vector<1x8x8xf32> -> vector<1x8x8xf32>
    "tpu.trace_stop"() : () -> ()
    %77 = vector.shape_cast %76 : vector<1x8x8xf32> to vector<8x8xf32>
    %78 = vector.extract_strided_slice %29 {offsets = [0, 16], sizes = [8, 8], strides = [1, 1]} : vector<8x32xf32> to vector<8x8xf32>
    %79 = vector.shape_cast %78 : vector<8x8xf32> to vector<1x8x8xf32>
    %80 = arith.truncf %79 : vector<1x8x8xf32> to vector<1x8x8xbf16>
    %81 = vector.extract_strided_slice %30 {offsets = [0, 16], sizes = [8, 8], strides = [1, 1]} : vector<8x32xf32> to vector<8x8xf32>
    %82 = vector.shape_cast %81 : vector<8x8xf32> to vector<1x8x8xf32>
    %83 = arith.truncf %82 : vector<1x8x8xf32> to vector<1x8x8xbf16>
    %84 = vector.extract_strided_slice %31 {offsets = [0, 16], sizes = [8, 8], strides = [1, 1]} : vector<8x32xf32> to vector<8x8xf32>
    %85 = vector.shape_cast %84 : vector<8x8xf32> to vector<1x8x8xf32>
    %86 = arith.truncf %85 : vector<1x8x8xf32> to vector<1x8x8xbf16>
    "tpu.trace_start"() <{level = 10 : i32, message = "bqd,bkd->bqk"}> : () -> ()
    %cst_22 = arith.constant dense<0.000000e+00> : vector<1x8x8xf32>
    %87 = tpu.matmul %80, %83, %cst_22 {dimension_numbers = #tpu.dot_dimension_numbers<[2], [2], [1], [1], [0, 0, 0, 1, 1, 1], [0], [0]>} : vector<1x8x8xbf16>, vector<1x8x8xbf16>, vector<1x8x8xf32> -> vector<1x8x8xf32>
    "tpu.trace_stop"() : () -> ()
    %cst_23 = arith.constant dense<0xFF800000> : vector<1x8xf32>
    %88 = vector.multi_reduction <maximumf>, %87, %cst_23 [2] : vector<1x8x8xf32> to vector<1x8xf32>
    %89 = vector.shape_cast %88 : vector<1x8xf32> to vector<1x8x1xf32>
    %90 = vector.broadcast %89 : vector<1x8x1xf32> to vector<1x8x8xf32>
    %91 = arith.subf %87, %90 : vector<1x8x8xf32>
    %92 = math.exp %91 : vector<1x8x8xf32>
    %cst_24 = arith.constant dense<0.000000e+00> : vector<1x8xf32>
    %93 = vector.multi_reduction <add>, %92, %cst_24 [2] : vector<1x8x8xf32> to vector<1x8xf32>
    %94 = vector.shape_cast %93 : vector<1x8xf32> to vector<1x8x1xf32>
    %95 = tpu.reciprocal %94 {approx = true} : vector<1x8x1xf32> -> vector<1x8x1xf32>
    %96 = vector.broadcast %95 : vector<1x8x1xf32> to vector<1x8x8xf32>
    %97 = arith.mulf %92, %96 : vector<1x8x8xf32>
    %98 = arith.truncf %97 : vector<1x8x8xf32> to vector<1x8x8xbf16>
    "tpu.trace_start"() <{level = 10 : i32, message = "bqk,bkd->bqd"}> : () -> ()
    %cst_25 = arith.constant dense<0.000000e+00> : vector<1x8x8xf32>
    %99 = tpu.matmul %98, %86, %cst_25 {dimension_numbers = #tpu.dot_dimension_numbers<[2], [1], [1], [2], [0, 0, 0, 1, 1, 2], [0], [0]>} : vector<1x8x8xbf16>, vector<1x8x8xbf16>, vector<1x8x8xf32> -> vector<1x8x8xf32>
    "tpu.trace_stop"() : () -> ()
    %100 = vector.shape_cast %99 : vector<1x8x8xf32> to vector<8x8xf32>
    %101 = vector.extract_strided_slice %29 {offsets = [0, 24], sizes = [8, 8], strides = [1, 1]} : vector<8x32xf32> to vector<8x8xf32>
    %102 = vector.shape_cast %101 : vector<8x8xf32> to vector<1x8x8xf32>
    %103 = arith.truncf %102 : vector<1x8x8xf32> to vector<1x8x8xbf16>
    %104 = vector.extract_strided_slice %30 {offsets = [0, 24], sizes = [8, 8], strides = [1, 1]} : vector<8x32xf32> to vector<8x8xf32>
    %105 = vector.shape_cast %104 : vector<8x8xf32> to vector<1x8x8xf32>
    %106 = arith.truncf %105 : vector<1x8x8xf32> to vector<1x8x8xbf16>
    %107 = vector.extract_strided_slice %31 {offsets = [0, 24], sizes = [8, 8], strides = [1, 1]} : vector<8x32xf32> to vector<8x8xf32>
    %108 = vector.shape_cast %107 : vector<8x8xf32> to vector<1x8x8xf32>
    %109 = arith.truncf %108 : vector<1x8x8xf32> to vector<1x8x8xbf16>
    "tpu.trace_start"() <{level = 10 : i32, message = "bqd,bkd->bqk"}> : () -> ()
    %cst_26 = arith.constant dense<0.000000e+00> : vector<1x8x8xf32>
    %110 = tpu.matmul %103, %106, %cst_26 {dimension_numbers = #tpu.dot_dimension_numbers<[2], [2], [1], [1], [0, 0, 0, 1, 1, 1], [0], [0]>} : vector<1x8x8xbf16>, vector<1x8x8xbf16>, vector<1x8x8xf32> -> vector<1x8x8xf32>
    "tpu.trace_stop"() : () -> ()
    %cst_27 = arith.constant dense<0xFF800000> : vector<1x8xf32>
    %111 = vector.multi_reduction <maximumf>, %110, %cst_27 [2] : vector<1x8x8xf32> to vector<1x8xf32>
    %112 = vector.shape_cast %111 : vector<1x8xf32> to vector<1x8x1xf32>
    %113 = vector.broadcast %112 : vector<1x8x1xf32> to vector<1x8x8xf32>
    %114 = arith.subf %110, %113 : vector<1x8x8xf32>
    %115 = math.exp %114 : vector<1x8x8xf32>
    %cst_28 = arith.constant dense<0.000000e+00> : vector<1x8xf32>
    %116 = vector.multi_reduction <add>, %115, %cst_28 [2] : vector<1x8x8xf32> to vector<1x8xf32>
    %117 = vector.shape_cast %116 : vector<1x8xf32> to vector<1x8x1xf32>
    %118 = tpu.reciprocal %117 {approx = true} : vector<1x8x1xf32> -> vector<1x8x1xf32>
    %119 = vector.broadcast %118 : vector<1x8x1xf32> to vector<1x8x8xf32>
    %120 = arith.mulf %115, %119 : vector<1x8x8xf32>
    %121 = arith.truncf %120 : vector<1x8x8xf32> to vector<1x8x8xbf16>
    "tpu.trace_start"() <{level = 10 : i32, message = "bqk,bkd->bqd"}> : () -> ()
    %cst_29 = arith.constant dense<0.000000e+00> : vector<1x8x8xf32>
    %122 = tpu.matmul %121, %109, %cst_29 {dimension_numbers = #tpu.dot_dimension_numbers<[2], [1], [1], [2], [0, 0, 0, 1, 1, 2], [0], [0]>} : vector<1x8x8xbf16>, vector<1x8x8xbf16>, vector<1x8x8xf32> -> vector<1x8x8xf32>
    "tpu.trace_stop"() : () -> ()
    %123 = vector.shape_cast %122 : vector<1x8x8xf32> to vector<8x8xf32>
    %124 = tpu.concatenate %54, %77, %100, %123 in 1 : vector<8x8xf32>, vector<8x8xf32>, vector<8x8xf32>, vector<8x8xf32> -> vector<8x32xf32>
    %125 = arith.truncf %124 : vector<8x32xf32> to vector<8x32xbf16>
    %c0_30 = arith.constant 0 : index
    %c0_31 = arith.constant 0 : index
    %126 = vector.load %arg5[%c0_30, %c0_31] : memref<32x32xbf16, #tpu.memory_space<vmem>>, vector<32x32xbf16>
    %cst_32 = arith.constant dense<0.000000e+00> : vector<8x32xf32>
    %127 = tpu.matmul %125, %126, %cst_32 {dimension_numbers = #tpu.dot_dimension_numbers<[1], [0], [0], [1], [0, 0, 1, 1], [], []>} : vector<8x32xbf16>, vector<32x32xbf16>, vector<8x32xf32> -> vector<8x32xf32>
    %c0_33 = arith.constant 0 : index
    %c0_34 = arith.constant 0 : index
    %128 = vector.load %arg6[%c0_33, %c0_34] : memref<1x32xf32, #tpu.memory_space<vmem>>, vector<1x32xf32>
    %129 = vector.broadcast %128 : vector<1x32xf32> to vector<8x32xf32>
    %130 = arith.addf %127, %129 : vector<8x32xf32>
    %131 = arith.addf %1, %130 : vector<8x32xf32>
    %cst_35 = arith.constant dense<0.000000e+00> : vector<8xf32>
    %132 = vector.multi_reduction <add>, %131, %cst_35 [1] : vector<8x32xf32> to vector<8xf32>
    %133 = vector.shape_cast %132 : vector<8xf32> to vector<8x1xf32>
    %cst_36 = arith.constant 3.200000e+01 : f32
    %134 = vector.broadcast %cst_36 : f32 to vector<8x1xf32>
    %135 = arith.divf %133, %134 : vector<8x1xf32>
    %136 = vector.broadcast %135 : vector<8x1xf32> to vector<8x32xf32>
    %137 = arith.subf %131, %136 : vector<8x32xf32>
    %138 = arith.mulf %137, %137 : vector<8x32xf32>
    %cst_37 = arith.constant dense<0.000000e+00> : vector<8xf32>
    %139 = vector.multi_reduction <add>, %138, %cst_37 [1] : vector<8x32xf32> to vector<8xf32>
    %140 = vector.shape_cast %139 : vector<8xf32> to vector<8x1xf32>
    %cst_38 = arith.constant 3.200000e+01 : f32
    %141 = vector.broadcast %cst_38 : f32 to vector<8x1xf32>
    %142 = arith.divf %140, %141 : vector<8x1xf32>
    %cst_39 = arith.constant 9.99999974E-6 : f32
    %143 = vector.broadcast %cst_39 : f32 to vector<8x1xf32>
    %144 = arith.addf %142, %143 : vector<8x1xf32>
    %145 = math.rsqrt %144 : vector<8x1xf32>
    %146 = vector.broadcast %145 : vector<8x1xf32> to vector<8x32xf32>
    %147 = arith.mulf %137, %146 : vector<8x32xf32>
    %148 = vector.broadcast %2 : vector<1x32xf32> to vector<8x32xf32>
    %149 = arith.mulf %147, %148 : vector<8x32xf32>
    %150 = vector.broadcast %3 : vector<1x32xf32> to vector<8x32xf32>
    %151 = arith.addf %149, %150 : vector<8x32xf32>
    %152 = arith.truncf %151 : vector<8x32xf32> to vector<8x32xbf16>
    %c0_40 = arith.constant 0 : index
    %c0_41 = arith.constant 0 : index
    %153 = vector.load %arg7[%c0_40, %c0_41] : memref<32x128xbf16, #tpu.memory_space<vmem>>, vector<32x128xbf16>
    %cst_42 = arith.constant dense<0.000000e+00> : vector<8x128xf32>
    %154 = tpu.matmul %152, %153, %cst_42 {dimension_numbers = #tpu.dot_dimension_numbers<[1], [0], [0], [1], [0, 0, 1, 1], [], []>} : vector<8x32xbf16>, vector<32x128xbf16>, vector<8x128xf32> -> vector<8x128xf32>
    %c0_43 = arith.constant 0 : index
    %c0_44 = arith.constant 0 : index
    %155 = vector.load %arg8[%c0_43, %c0_44] : memref<1x128xf32, #tpu.memory_space<vmem>>, vector<1x128xf32>
    %156 = vector.broadcast %155 : vector<1x128xf32> to vector<8x128xf32>
    %157 = arith.addf %154, %156 : vector<8x128xf32>
    %cst_45 = arith.constant 5.000000e-01 : f32
    %158 = vector.broadcast %cst_45 : f32 to vector<8x128xf32>
    %159 = arith.mulf %158, %157 : vector<8x128xf32>
    %cst_46 = arith.constant 0.707106769 : f32
    %160 = vector.broadcast %cst_46 : f32 to vector<8x128xf32>
    %161 = arith.mulf %157, %160 : vector<8x128xf32>
    %162 = math.erf %161 : vector<8x128xf32>
    %cst_47 = arith.constant 1.000000e+00 : f32
    %163 = vector.broadcast %cst_47 : f32 to vector<8x128xf32>
    %164 = arith.addf %163, %162 : vector<8x128xf32>
    %165 = arith.mulf %159, %164 : vector<8x128xf32>
    %166 = arith.truncf %165 : vector<8x128xf32> to vector<8x128xbf16>
    %c0_48 = arith.constant 0 : index
    %c0_49 = arith.constant 0 : index
    %167 = vector.load %arg9[%c0_48, %c0_49] : memref<128x32xbf16, #tpu.memory_space<vmem>>, vector<128x32xbf16>
    %cst_50 = arith.constant dense<0.000000e+00> : vector<8x32xf32>
    %168 = tpu.matmul %166, %167, %cst_50 {dimension_numbers = #tpu.dot_dimension_numbers<[1], [0], [0], [1], [0, 0, 1, 1], [], []>} : vector<8x128xbf16>, vector<128x32xbf16>, vector<8x32xf32> -> vector<8x32xf32>
    %c0_51 = arith.constant 0 : index
    %c0_52 = arith.constant 0 : index
    %169 = vector.load %arg10[%c0_51, %c0_52] : memref<1x32xf32, #tpu.memory_space<vmem>>, vector<1x32xf32>
    %170 = vector.broadcast %169 : vector<1x32xf32> to vector<8x32xf32>
    %171 = arith.addf %168, %170 : vector<8x32xf32>
    %cst_53 = arith.constant 5.000000e-01 : f32
    %172 = vector.broadcast %cst_53 : f32 to vector<8x32xf32>
    %173 = arith.mulf %172, %171 : vector<8x32xf32>
    %cst_54 = arith.constant 0.707106769 : f32
    %174 = vector.broadcast %cst_54 : f32 to vector<8x32xf32>
    %175 = arith.mulf %171, %174 : vector<8x32xf32>
    %176 = math.erf %175 : vector<8x32xf32>
    %cst_55 = arith.constant 1.000000e+00 : f32
    %177 = vector.broadcast %cst_55 : f32 to vector<8x32xf32>
    %178 = arith.addf %177, %176 : vector<8x32xf32>
    %179 = arith.mulf %173, %178 : vector<8x32xf32>
    %180 = arith.addf %131, %179 : vector<8x32xf32>
    %181 = vector.shape_cast %180 : vector<8x32xf32> to vector<1x8x32xf32>
    %c0_56 = arith.constant 0 : index
    %c0_57 = arith.constant 0 : index
    %c0_58 = arith.constant 0 : index
    %182 = vector.load %arg11[%c0_56, %c0_57, %c0_58] : memref<1x8x32xf32, #tpu.memory_space<vmem>>, vector<1x8x32xf32>
    tpu.vector_store %arg11[%c0_56, %c0_57, %c0_58], %181 {strides = array<i32>} : memref<1x8x32xf32, #tpu.memory_space<vmem>>, vector<1x8x32xf32>,
    return
  }
  func.func @transform_0(%arg0: i32) -> (i32, i32, i32) {
    %c0_i32 = arith.constant 0 : i32
    %c0_i32_0 = arith.constant 0 : i32
    %c0_i32_1 = arith.constant 0 : i32
    return %arg0, %c0_i32, %c0_i32_0 : i32, i32, i32
  }
  func.func @transform_1(%arg0: i32) -> (i32, i32) {
    %c0_i32 = arith.constant 0 : i32
    %c0_i32_0 = arith.constant 0 : i32
    %c0_i32_1 = arith.constant 0 : i32
    return %c0_i32, %c0_i32_0 : i32, i32
  }
  func.func @transform_2(%arg0: i32) -> (i32, i32) {
    %c0_i32 = arith.constant 0 : i32
    %c0_i32_0 = arith.constant 0 : i32
    %c0_i32_1 = arith.constant 0 : i32
    return %c0_i32, %c0_i32_0 : i32, i32
  }
  func.func @transform_3(%arg0: i32) -> (i32, i32) {
    %c0_i32 = arith.constant 0 : i32
    %c0_i32_0 = arith.constant 0 : i32
    %c0_i32_1 = arith.constant 0 : i32
    return %c0_i32, %c0_i32_0 : i32, i32
  }
  func.func @transform_4(%arg0: i32) -> (i32, i32) {
    %c0_i32 = arith.constant 0 : i32
    %c0_i32_0 = arith.constant 0 : i32
    %c0_i32_1 = arith.constant 0 : i32
    return %c0_i32, %c0_i32_0 : i32, i32
  }
  func.func @transform_5(%arg0: i32) -> (i32, i32) {
    %c0_i32 = arith.constant 0 : i32
    %c0_i32_0 = arith.constant 0 : i32
    %c0_i32_1 = arith.constant 0 : i32
    return %c0_i32, %c0_i32_0 : i32, i32
  }
  func.func @transform_6(%arg0: i32) -> (i32, i32) {
    %c0_i32 = arith.constant 0 : i32
    %c0_i32_0 = arith.constant 0 : i32
    %c0_i32_1 = arith.constant 0 : i32
    return %c0_i32, %c0_i32_0 : i32, i32
  }
  func.func @transform_7(%arg0: i32) -> (i32, i32) {
    %c0_i32 = arith.constant 0 : i32
    %c0_i32_0 = arith.constant 0 : i32
    %c0_i32_1 = arith.constant 0 : i32
    return %c0_i32, %c0_i32_0 : i32, i32
  }
  func.func @transform_8(%arg0: i32) -> (i32, i32) {
    %c0_i32 = arith.constant 0 : i32
    %c0_i32_0 = arith.constant 0 : i32
    %c0_i32_1 = arith.constant 0 : i32
    return %c0_i32, %c0_i32_0 : i32, i32
  }
  func.func @transform_9(%arg0: i32) -> (i32, i32) {
    %c0_i32 = arith.constant 0 : i32
    %c0_i32_0 = arith.constant 0 : i32
    %c0_i32_1 = arith.constant 0 : i32
    return %c0_i32, %c0_i32_0 : i32, i32
  }
  func.func @transform_10(%arg0: i32) -> (i32, i32, i32) {
    %c0_i32 = arith.constant 0 : i32
    %c0_i32_0 = arith.constant 0 : i32
    %c0_i32_1 = arith.constant 0 : i32
    return %arg0, %c0_i32, %c0_i32_0 : i32, i32, i32
  }
}

</mosaic_0001>

<llo_original>
// kernel: tpu_custom_call.1
$region0: #{tpu_custom_call.1}
  #allocation0 [shape = 'u32[]', space=smem, size = 0x4, offset = 0x4, fixed_abs, tag = 'smem constant byte address 0x4 - core index']
  #allocation1 [shape = 'u32[144,128]{1,0:T(1,128)}', space=vmem, size = 0x12000, scoped, tag = 'internal scratch']
  %s0 = inlined_call_operand.vmem [shape: f32[2,8,32], index: 0, kind: input, shape index: {}]
  %s1 = inlined_call_operand.vmem [shape: f32[1,32], index: 1, kind: input, shape index: {}]
  %s2 = inlined_call_operand.vmem [shape: f32[1,32], index: 2, kind: input, shape index: {}]
  %s3 = inlined_call_operand.vmem [shape: bf16[32,96], index: 3, kind: input, shape index: {}]
  %s4 = inlined_call_operand.vmem [shape: bf16[32,32], index: 4, kind: input, shape index: {}]
  %s5 = inlined_call_operand.vmem [shape: f32[1,32], index: 5, kind: input, shape index: {}]
  %s6 = inlined_call_operand.vmem [shape: bf16[32,128], index: 6, kind: input, shape index: {}]
  %s7 = inlined_call_operand.vmem [shape: f32[1,128], index: 7, kind: input, shape index: {}]
  %s8 = inlined_call_operand.vmem [shape: bf16[128,32], index: 8, kind: input, shape index: {}]
  %s9 = inlined_call_operand.vmem [shape: f32[1,32], index: 9, kind: input, shape index: {}]
  %s10 = inlined_call_operand.hbm [shape: f32[2,8,32], index: 10, kind: output, shape index: {}]
  %s11 = sld [smem:[#allocation0]]
  $region73: #{tpu_custom_call.1} parent=0
    _
  %s13 = ssub.s32 1, %s11
  %s14 = scalar_select 0, %s13, %s11
  $region1: #{tpu_custom_call.1} parent=0
    #allocation2 [shape = 'u8[8192]{0}', space=vmem, size = 0x2000, scoped, tag = 'output window, operand 0']
    #allocation3 [shape = 's32[2]{0}', space=sflag, size = 0x8, scoped, tag = 'scoped memory for tpu_custom_call.1']
    %15 = vsyncpa [#allocation3], 0
    %s16 = scalar_lea.sflag [#allocation3], 1
    %17 = vsyncpa %s16, 0
    loop: start=0, step=1, limit=4
    $region2: #{tpu_custom_call.1} parent=1 // loop_pre_header
      _
    $region3: #{tpu_custom_call.1} parent=1 // loop_header
      %s19 = sphi 0, %s23
      %p20 = scmp.ge.s32.totalorder %s19, 4
      %s29 = sphi 0, %s31
      %s32 = sphi 0, %s29
      %s33 = sphi 0, %s32
      %s49 = sphi 0, %s33
      %s53 = sphi 0, %s53
      %s55 = sphi 0, %s53
      %s56 = sphi 0, %s55
      %s70 = sphi 0, %s56
      %s74 = sphi 0, %s74
      %s76 = sphi 0, %s74
      %s77 = sphi 0, %s76
      %s91 = sphi 0, %s77
      %s95 = sphi 0, %s95
      %s97 = sphi 0, %s95
      %s98 = sphi 0, %s97
      %s112 = sphi 0, %s98
      %s116 = sphi 0, %s116
      %s118 = sphi 0, %s116
      %s119 = sphi 0, %s118
      %s133 = sphi 0, %s119
      %s137 = sphi 0, %s137
      %s139 = sphi 0, %s137
      %s140 = sphi 0, %s139
      %s154 = sphi 0, %s140
      %s158 = sphi 0, %s158
      %s160 = sphi 0, %s158
      %s161 = sphi 0, %s160
      %s175 = sphi 0, %s161
      %s179 = sphi 0, %s179
      %s181 = sphi 0, %s179
      %s182 = sphi 0, %s181
      %s196 = sphi 0, %s182
      %s200 = sphi 0, %s200
      %s202 = sphi 0, %s200
      %s203 = sphi 0, %s202
      %s217 = sphi 0, %s203
      %s221 = sphi 0, %s221
      %s223 = sphi 0, %s221
      %s224 = sphi 0, %s223
      %s238 = sphi 0, %s224
      %s244 = sphi 0, %s246
      %s247 = sphi 0, %s244
      %s248 = sphi 0, %s247
      %s264 = sphi 0, %s248
    $region4: #{tpu_custom_call.1} parent=1 // loop_header_branch
      %22 = sbr.rel (%p20) target = $region8
    $region5: #{tpu_custom_call.1} parent=1 // loop_body
      %s24 = ssub.s32 %s19, 1
      %s25 = ssub.s32 %s19, 2
      %s26 = sadd.s32 %s19, 1
      %s27 = ssub.s32 %s19, %s26
      %p28 = scmp.eq.s32.totalorder %s27, 0
      %s30 = sadd.s32 %s29, 1
      %s31 = scalar_select %p28, %s29, %s30
      %p34 = pneg %p28
      %p35 = scmp.eq.s32.totalorder %s19, 1
      %p36 = por %p34, %p35
      %p37 = scmp.ne.s32.totalorder %s29, %s32
      %p38 = scmp.eq.s32.totalorder %s19, 0
      %p39 = por %p37, %p38
      %p40 = scmp.ne.s32.totalorder %s29, %s32
      %p41 = scmp.eq.s32.totalorder %s24, 1
      %p42 = por %p40, %p41
      %p43 = scmp.ne.s32.totalorder %s32, %s33
      %p44 = scmp.eq.s32.totalorder %s24, 0
      %p45 = por %p43, %p44
      %p46 = scmp.ne.s32.totalorder %s32, %s33
      %p47 = scmp.eq.s32.totalorder %s25, 1
      %p48 = por %p46, %p47
      %p50 = scmp.ne.s32.totalorder %s33, %s49
      %p51 = scmp.eq.s32.totalorder %s25, 0
      %p52 = por %p50, %p51
      %s54 = sadd.s32 %s53, 1
      %p57 = scmp.eq.s32.totalorder %s19, 1
      %p58 = scmp.ne.s32.totalorder %s53, %s55
      %p59 = scmp.eq.s32.totalorder %s19, 0
      %p60 = por %p58, %p59
      %p61 = scmp.ne.s32.totalorder %s53, %s55
      %p62 = scmp.eq.s32.totalorder %s24, 1
      %p63 = por %p61, %p62
      %p64 = scmp.ne.s32.totalorder %s55, %s56
      %p65 = scmp.eq.s32.totalorder %s24, 0
      %p66 = por %p64, %p65
      %p67 = scmp.ne.s32.totalorder %s55, %s56
      %p68 = scmp.eq.s32.totalorder %s25, 1
      %p69 = por %p67, %p68
      %p71 = scmp.ne.s32.totalorder %s56, %s70
      %p72 = scmp.eq.s32.totalorder %s25, 0
      %p73 = por %p71, %p72
      %s75 = sadd.s32 %s74, 1
      %p78 = scmp.eq.s32.totalorder %s19, 1
      %p79 = scmp.ne.s32.totalorder %s74, %s76
      %p80 = scmp.eq.s32.totalorder %s19, 0
      %p81 = por %p79, %p80
      %p82 = scmp.ne.s32.totalorder %s74, %s76
      %p83 = scmp.eq.s32.totalorder %s24, 1
      %p84 = por %p82, %p83
      %p85 = scmp.ne.s32.totalorder %s76, %s77
      %p86 = scmp.eq.s32.totalorder %s24, 0
      %p87 = por %p85, %p86
      %p88 = scmp.ne.s32.totalorder %s76, %s77
      %p89 = scmp.eq.s32.totalorder %s25, 1
      %p90 = por %p88, %p89
      %p92 = scmp.ne.s32.totalorder %s77, %s91
      %p93 = scmp.eq.s32.totalorder %s25, 0
      %p94 = por %p92, %p93
      %s96 = sadd.s32 %s95, 1
      %p99 = scmp.eq.s32.totalorder %s19, 1
      %p100 = scmp.ne.s32.totalorder %s95, %s97
      %p101 = scmp.eq.s32.totalorder %s19, 0
      %p102 = por %p100, %p101
      %p103 = scmp.ne.s32.totalorder %s95, %s97
      %p104 = scmp.eq.s32.totalorder %s24, 1
      %p105 = por %p103, %p104
      %p106 = scmp.ne.s32.totalorder %s97, %s98
      %p107 = scmp.eq.s32.totalorder %s24, 0
      %p108 = por %p106, %p107
      %p109 = scmp.ne.s32.totalorder %s97, %s98
      %p110 = scmp.eq.s32.totalorder %s25, 1
      %p111 = por %p109, %p110
      %p113 = scmp.ne.s32.totalorder %s98, %s112
      %p114 = scmp.eq.s32.totalorder %s25, 0
      %p115 = por %p113, %p114
      %s117 = sadd.s32 %s116, 1
      %p120 = scmp.eq.s32.totalorder %s19, 1
      %p121 = scmp.ne.s32.totalorder %s116, %s118
      %p122 = scmp.eq.s32.totalorder %s19, 0
      %p123 = por %p121, %p122
      %p124 = scmp.ne.s32.totalorder %s116, %s118
      %p125 = scmp.eq.s32.totalorder %s24, 1
      %p126 = por %p124, %p125
      %p127 = scmp.ne.s32.totalorder %s118, %s119
      %p128 = scmp.eq.s32.totalorder %s24, 0
      %p129 = por %p127, %p128
      %p130 = scmp.ne.s32.totalorder %s118, %s119
      %p131 = scmp.eq.s32.totalorder %s25, 1
      %p132 = por %p130, %p131
      %p134 = scmp.ne.s32.totalorder %s119, %s133
      %p135 = scmp.eq.s32.totalorder %s25, 0
      %p136 = por %p134, %p135
      %s138 = sadd.s32 %s137, 1
      %p141 = scmp.eq.s32.totalorder %s19, 1
      %p142 = scmp.ne.s32.totalorder %s137, %s139
      %p143 = scmp.eq.s32.totalorder %s19, 0
      %p144 = por %p142, %p143
      %p145 = scmp.ne.s32.totalorder %s137, %s139
      %p146 = scmp.eq.s32.totalorder %s24, 1
      %p147 = por %p145, %p146
      %p148 = scmp.ne.s32.totalorder %s139, %s140
      %p149 = scmp.eq.s32.totalorder %s24, 0
      %p150 = por %p148, %p149
      %p151 = scmp.ne.s32.totalorder %s139, %s140
      %p152 = scmp.eq.s32.totalorder %s25, 1
      %p153 = por %p151, %p152
      %p155 = scmp.ne.s32.totalorder %s140, %s154
      %p156 = scmp.eq.s32.totalorder %s25, 0
      %p157 = por %p155, %p156
      %s159 = sadd.s32 %s158, 1
      %p162 = scmp.eq.s32.totalorder %s19, 1
      %p163 = scmp.ne.s32.totalorder %s158, %s160
      %p164 = scmp.eq.s32.totalorder %s19, 0
      %p165 = por %p163, %p164
      %p166 = scmp.ne.s32.totalorder %s158, %s160
      %p167 = scmp.eq.s32.totalorder %s24, 1
      %p168 = por %p166, %p167
      %p169 = scmp.ne.s32.totalorder %s160, %s161
      %p170 = scmp.eq.s32.totalorder %s24, 0
      %p171 = por %p169, %p170
      %p172 = scmp.ne.s32.totalorder %s160, %s161
      %p173 = scmp.eq.s32.totalorder %s25, 1
      %p174 = por %p172, %p173
      %p176 = scmp.ne.s32.totalorder %s161, %s175
      %p177 = scmp.eq.s32.totalorder %s25, 0
      %p178 = por %p176, %p177
      %s180 = sadd.s32 %s179, 1
      %p183 = scmp.eq.s32.totalorder %s19, 1
      %p184 = scmp.ne.s32.totalorder %s179, %s181
      %p185 = scmp.eq.s32.totalorder %s19, 0
      %p186 = por %p184, %p185
      %p187 = scmp.ne.s32.totalorder %s179, %s181
      %p188 = scmp.eq.s32.totalorder %s24, 1
      %p189 = por %p187, %p188
      %p190 = scmp.ne.s32.totalorder %s181, %s182
      %p191 = scmp.eq.s32.totalorder %s24, 0
      %p192 = por %p190, %p191
      %p193 = scmp.ne.s32.totalorder %s181, %s182
      %p194 = scmp.eq.s32.totalorder %s25, 1
      %p195 = por %p193, %p194
      %p197 = scmp.ne.s32.totalorder %s182, %s196
      %p198 = scmp.eq.s32.totalorder %s25, 0
      %p199 = por %p197, %p198
      %s201 = sadd.s32 %s200, 1
      %p204 = scmp.eq.s32.totalorder %s19, 1
      %p205 = scmp.ne.s32.totalorder %s200, %s202
      %p206 = scmp.eq.s32.totalorder %s19, 0
      %p207 = por %p205, %p206
      %p208 = scmp.ne.s32.totalorder %s200, %s202
      %p209 = scmp.eq.s32.totalorder %s24, 1
      %p210 = por %p208, %p209
      %p211 = scmp.ne.s32.totalorder %s202, %s203
      %p212 = scmp.eq.s32.totalorder %s24, 0
      %p213 = por %p211, %p212
      %p214 = scmp.ne.s32.totalorder %s202, %s203
      %p215 = scmp.eq.s32.totalorder %s25, 1
      %p216 = por %p214, %p215
      %p218 = scmp.ne.s32.totalorder %s203, %s217
      %p219 = scmp.eq.s32.totalorder %s25, 0
      %p220 = por %p218, %p219
      %s222 = sadd.s32 %s221, 1
      %p225 = scmp.eq.s32.totalorder %s19, 1
      %p226 = scmp.ne.s32.totalorder %s221, %s223
      %p227 = scmp.eq.s32.totalorder %s19, 0
      %p228 = por %p226, %p227
      %p229 = scmp.ne.s32.totalorder %s221, %s223
      %p230 = scmp.eq.s32.totalorder %s24, 1
      %p231 = por %p229, %p230
      %p232 = scmp.ne.s32.totalorder %s223, %s224
      %p233 = scmp.eq.s32.totalorder %s24, 0
      %p234 = por %p232, %p233
      %p235 = scmp.ne.s32.totalorder %s223, %s224
      %p236 = scmp.eq.s32.totalorder %s25, 1
      %p237 = por %p235, %p236
      %p239 = scmp.ne.s32.totalorder %s224, %s238
      %p240 = scmp.eq.s32.totalorder %s25, 0
      %p241 = por %p239, %p240
      %s242 = ssub.s32 %s19, %s26
      %p243 = scmp.eq.s32.totalorder %s242, 0
      %s245 = sadd.s32 %s244, 1
      %s246 = scalar_select %p243, %s244, %s245
      %p249 = pneg %p243
      %p250 = scmp.eq.s32.totalorder %s19, 1
      %p251 = por %p249, %p250
      %p252 = scmp.ne.s32.totalorder %s244, %s247
      %p253 = scmp.eq.s32.totalorder %s19, 0
      %p254 = por %p252, %p253
      %p255 = scmp.ne.s32.totalorder %s244, %s247
      %p256 = scmp.eq.s32.totalorder %s24, 1
      %p257 = por %p255, %p256
      %p258 = scmp.ne.s32.totalorder %s247, %s248
      %p259 = scmp.eq.s32.totalorder %s24, 0
      %p260 = por %p258, %p259
      %p261 = scmp.ne.s32.totalorder %s247, %s248
      %p262 = scmp.eq.s32.totalorder %s25, 1
      %p263 = por %p261, %p262
      %p265 = scmp.ne.s32.totalorder %s248, %s264
      %p266 = scmp.eq.s32.totalorder %s25, 0
      %p267 = por %p265, %p266
      %p268 = scmp.le.s32.totalorder 1, %s19
      %p269 = scmp.lt.s32.totalorder %s19, 3
      %p270 = pnand %p268, %p269
      %p271 = pneg %p270
      // Predicated region
      $region9: #{tpu_custom_call.1} parent=5 // pred_check
        _
      $region10: #{tpu_custom_call.1} parent=5 // pred_check_branch
        %273 = sbr.rel (%p270) target = $region12
      $region11: #{tpu_custom_call.1} parent=5 // pred_region
        %s274 = ssub.s32 %s19, 1
        // Predicated region
        $region13: #{tpu_custom_call.1} parent=11 // pred_check
          %p275 = pneg %p66
        $region14: #{tpu_custom_call.1} parent=11 // pred_check_branch
          %277 = sbr.rel (%p275) target = $region16
        $region15: #{tpu_custom_call.1} parent=11 // pred_region
          _
        $region16: #{tpu_custom_call.1} parent=11 // pred_fallthru
          _
        // Predicated region
        $region17: #{tpu_custom_call.1} parent=11 // pred_check
          %p278 = pneg %p87
        $region18: #{tpu_custom_call.1} parent=11 // pred_check_branch
          %280 = sbr.rel (%p278) target = $region20
        $region19: #{tpu_custom_call.1} parent=11 // pred_region
          _
        $region20: #{tpu_custom_call.1} parent=11 // pred_fallthru
          _
        // Predicated region
        $region21: #{tpu_custom_call.1} parent=11 // pred_check
          %p281 = pneg %p108
        $region22: #{tpu_custom_call.1} parent=11 // pred_check_branch
          %283 = sbr.rel (%p281) target = $region24
        $region23: #{tpu_custom_call.1} parent=11 // pred_region
          _
        $region24: #{tpu_custom_call.1} parent=11 // pred_fallthru
          _
        // Predicated region
        $region25: #{tpu_custom_call.1} parent=11 // pred_check
          %p284 = pneg %p129
        $region26: #{tpu_custom_call.1} parent=11 // pred_check_branch
          %286 = sbr.rel (%p284) target = $region28
        $region27: #{tpu_custom_call.1} parent=11 // pred_region
          _
        $region28: #{tpu_custom_call.1} parent=11 // pred_fallthru
          _
        // Predicated region
        $region29: #{tpu_custom_call.1} parent=11 // pred_check
          %p287 = pneg %p150
        $region30: #{tpu_custom_call.1} parent=11 // pred_check_branch
          %289 = sbr.rel (%p287) target = $region32
        $region31: #{tpu_custom_call.1} parent=11 // pred_region
          _
        $region32: #{tpu_custom_call.1} parent=11 // pred_fallthru
          _
        // Predicated region
        $region33: #{tpu_custom_call.1} parent=11 // pred_check
          %p290 = pneg %p171
        $region34: #{tpu_custom_call.1} parent=11 // pred_check_branch
          %292 = sbr.rel (%p290) target = $region36
        $region35: #{tpu_custom_call.1} parent=11 // pred_region
          _
        $region36: #{tpu_custom_call.1} parent=11 // pred_fallthru
          _
        // Predicated region
        $region37: #{tpu_custom_call.1} parent=11 // pred_check
          %p293 = pneg %p192
        $region38: #{tpu_custom_call.1} parent=11 // pred_check_branch
          %295 = sbr.rel (%p293) target = $region40
        $region39: #{tpu_custom_call.1} parent=11 // pred_region
          _
        $region40: #{tpu_custom_call.1} parent=11 // pred_fallthru
          _
        // Predicated region
        $region41: #{tpu_custom_call.1} parent=11 // pred_check
          %p296 = pneg %p213
        $region42: #{tpu_custom_call.1} parent=11 // pred_check_branch
          %298 = sbr.rel (%p296) target = $region44
        $region43: #{tpu_custom_call.1} parent=11 // pred_region
          _
        $region44: #{tpu_custom_call.1} parent=11 // pred_fallthru
          _
        // Predicated region
        $region45: #{tpu_custom_call.1} parent=11 // pred_check
          %p299 = pneg %p234
        $region46: #{tpu_custom_call.1} parent=11 // pred_check_branch
          %301 = sbr.rel (%p299) target = $region48
        $region47: #{tpu_custom_call.1} parent=11 // pred_region
          _
        $region48: #{tpu_custom_call.1} parent=11 // pred_fallthru
          _
      $region12: #{tpu_custom_call.1} parent=5 // pred_fallthru
        _
      %p302 = scmp.lt.s32.totalorder %s19, 2
      // Predicated region
      $region49: #{tpu_custom_call.1} parent=5 // pred_check
        %p303 = pneg %p302
      $region50: #{tpu_custom_call.1} parent=5 // pred_check_branch
        %305 = sbr.rel (%p303) target = $region52
      $region51: #{tpu_custom_call.1} parent=5 // pred_region
        // Predicated region
        $region53: #{tpu_custom_call.1} parent=51 // pred_check
          %p306 = pneg %p39
        $region54: #{tpu_custom_call.1} parent=51 // pred_check_branch
          %308 = sbr.rel (%p306) target = $region56
        $region55: #{tpu_custom_call.1} parent=51 // pred_region
          %p309 = scmp.lt.s32.totalorder %s19, 1
          %s310 = scalar_select %p309, %s19, 1
          %s311 = smul.addr %s310, 8
          %s312 = scalar_lea.vmem %s0, %s311
        $region56: #{tpu_custom_call.1} parent=51 // pred_fallthru
          _
      $region52: #{tpu_custom_call.1} parent=5 // pred_fallthru
        _
      %p313 = scmp.le.s32.totalorder 1, %s19
      %p314 = scmp.lt.s32.totalorder %s19, 3
      %p315 = pnand %p313, %p314
      %p316 = pneg %p315
      // Predicated region
      $region57: #{tpu_custom_call.1} parent=5 // pred_check
        _
      $region58: #{tpu_custom_call.1} parent=5 // pred_check_branch
        %318 = sbr.rel (%p315) target = $region60
      $region59: #{tpu_custom_call.1} parent=5 // pred_region
        %s319 = ssub.s32 %s19, 1
        %p320 = scmp.lt.s32.totalorder %s24, 1
        %s321 = scalar_select %p320, %s24, 1
        %s322 = smul.addr %s321, 8
        %s323 = scalar_lea.vmem %s0, %s322
        %p324 = pneg %p45
        %p325 = pneg %p42
        %p326 = pneg %p66
        %p327 = pneg %p63
        %p328 = pneg %p87
        %p329 = pneg %p84
        %p330 = pneg %p108
        %p331 = pneg %p105
        %p332 = pneg %p129
        %p333 = pneg %p126
        %p334 = pneg %p150
        %p335 = pneg %p147
        %p336 = pneg %p171
        %p337 = pneg %p168
        %p338 = pneg %p192
        %p339 = pneg %p189
        %p340 = pneg %p213
        %p341 = pneg %p210
        %p342 = pneg %p234
        %p343 = pneg %p231
        %p344 = pneg %p260
        %p345 = pneg %p257
        %s346 = sand.u32 %s247, 1
        %s347 = scalar_lea.sflag [#allocation3], %s346
        %s348 = sand.u32 %s247, 1
        %s349 = smul.addr %s348, 8
        %s350 = scalar_lea.vmem [#allocation2], %s349
        %p351 = scmp.lt.s32.totalorder %s24, 1
        %s352 = scalar_select %p351, %s24, 1
        %s353 = smul.addr %s352, 8
        %s354 = scalar_lea.vmem %s0, %s353
        %v356 = vld [vmem:[%s354] sm:$0xff]
        %v357 = vld [vmem:[%s1] sm:$0x1]
        %v358 = vld [vmem:[%s2] sm:$0x1]
        %vm359 = vcmask 261120
        %v360 = vsel %vm359, %v356, 0.0
        %361 = vadd.xlane.f32.xlu0 %v360
        %v362 = vpop.xlane.xlu0 %361
        %v363 = vrcp.pop 32.0
        %v364 = vmul.f32 %v362, %v363
        %v365 = vsub.f32 %v356, %v364
        %v366 = vmul.f32 %v365, %v365
        %v367 = vsel %vm359, %v366, 0.0
        %368 = vadd.xlane.f32.xlu0 %v367
        %v369 = vpop.xlane.xlu0 %368
        %v370 = vmul.f32 %v369, %v363
        %v371 = vadd.f32 %v370, 1e-05
        %v372 = vrsqrt.pop %v371
        %v373 = vmul.f32 %v365, %v372
        %v375 = vlaneseq
        %v376 = vshrl.u32 %v375, 7
        %v377 = vsub.s32 0, %v376
        %v378 = vrot.slane %v357, %v377
        %v380 = vmul.f32 %v373, %v378
        %v382 = vlaneseq
        %v383 = vshrl.u32 %v382, 7
        %v384 = vsub.s32 0, %v383
        %v385 = vrot.slane %v358, %v384
        %v387 = vadd.f32 %v380, %v385
        %v388 = vpack.c.bf16 %v387, %v387
        %v389 = vld [vmem:[%s3] sm:$0xf]
        %v390 = vld [vmem:[%s3 + $0x4] sm:$0xf]
        %v391 = vld [vmem:[%s3 + $0x8] sm:$0xf]
        %v392 = vld [vmem:[%s3 + $0xc] sm:$0xf]
        %v397 = vunpack.c.l.b16 %v389
        %v398 = vunpack.c.l.b16 %v390
        %v399 = vunpack.c.l.b16 %v391
        %v400 = vunpack.c.l.b16 %v392
        %v401 = vpack.c.b16 %v398, %v397
        %v402 = vpack.c.b16 %v400, %v399
        %v406 = vsel %vm359, %v388, 0
        %408 = vmatprep.subr.bf16.mxu0 0
        %409 = vmatpush1.bf16.msra.mxu0 %v401
        %410 = vmatprep.subr.bf16.mxu0 0
        %411 = vmatpush1.bf16.msra.mxu0 %v402
        %412 = vmatprep.subr.bf16.mxu0 0
        %413 = vmatpush1.bf16.msra.mxu0 0
        %414 = vmatprep.subr.bf16.mxu0 0
        %415 = vmatpush1.bf16.msra.mxu0 0
        %416 = vmatprep.subr.bf16.mxu0 0
        %417 = vmatpush1.bf16.msra.mxu0 0
        %418 = vmatprep.subr.bf16.mxu0 0
        %419 = vmatpush1.bf16.msra.mxu0 0
        %420 = vmatprep.subr.bf16.mxu0 0
        %421 = vmatpush1.bf16.msra.mxu0 0
        %422 = vmatprep.subr.bf16.mxu0 0
        %423 = vmatpush1.bf16.msra.mxu0 0
        %424 = vmatprep.subr.bf16.mxu0 0
        %425 = vmatpush1.bf16.msra.mxu0 0
        %426 = vmatprep.subr.bf16.mxu0 0
        %427 = vmatpush1.bf16.msra.mxu0 0
        %428 = vmatprep.subr.bf16.mxu0 0
        %429 = vmatpush1.bf16.msra.mxu0 0
        %430 = vmatprep.subr.bf16.mxu0 0
        %431 = vmatpush1.bf16.msra.mxu0 0
        %432 = vmatprep.subr.bf16.mxu0 0
        %433 = vmatpush1.bf16.msra.mxu0 0
        %434 = vmatprep.subr.bf16.mxu0 0
        %435 = vmatpush1.bf16.msra.mxu0 0
        %436 = vmatprep.subr.bf16.mxu0 0
        %437 = vmatpush1.bf16.msra.mxu0 0
        %438 = vmatprep.subr.bf16.mxu0 0
        %439 = vmatpush1.bf16.msra.mxu0 0
        %440 = vmatprep.mubr.bf16.mxu0 0
        %441 = vmatmul.mubr.bf16.gmra.mrb[0].mxu0 %v406
        %v442 = vpop.f32.mrb[0].mxu0
        %v443 = vadd.f32 0.0, %v442
        %v444 = vpop.f32.mrb[0].mxu0
        %v445 = vpop.f32.mrb[0].mxu0
        %v446 = vpop.f32.mrb[0].mxu0
        %447 = vdwg.mxu0
        %v448 = vmul.f32 %v443, 0.35355338
        %v449 = vpack.c.bf16 %v448, %v448
        %v450 = vpack.c.bf16 %v443, %v443
        %452 = vrot.lane.b32.xlu0 %v450, 96
        %v453 = vpop.permute.xlu0 %452
        %vm454 = vcmask 64512
        %v456 = vsel %vm454, %v449, 0
        %v459 = vsel %vm454, %v453, 0
        %461 = vmatprep.subr.bf16.mxu0 0
        %462 = vmatpush1.bf16.xpose.msra.mxu0 %v459
        %463 = vmatprep.subr.bf16.mxu0 0
        %464 = vmatpush1.bf16.xpose.msra.mxu0 0
        %465 = vmatprep.subr.bf16.mxu0 0
        %466 = vmatpush1.bf16.xpose.msra.mxu0 0
        %467 = vmatprep.subr.bf16.mxu0 0
        %468 = vmatpush1.bf16.xpose.msra.mxu0 0
        %469 = vmatprep.subr.bf16.mxu0 0
        %470 = vmatpush1.bf16.xpose.msra.mxu0 0
        %471 = vmatprep.subr.bf16.mxu0 0
        %472 = vmatpush1.bf16.xpose.msra.mxu0 0
        %473 = vmatprep.subr.bf16.mxu0 0
        %474 = vmatpush1.bf16.xpose.msra.mxu0 0
        %475 = vmatprep.subr.bf16.mxu0 0
        %476 = vmatpush1.bf16.xpose.msra.mxu0 0
        %477 = vmatprep.subr.bf16.mxu0 0
        %478 = vmatpush1.bf16.xpose.msra.mxu0 0
        %479 = vmatprep.subr.bf16.mxu0 0
        %480 = vmatpush1.bf16.xpose.msra.mxu0 0
        %481 = vmatprep.subr.bf16.mxu0 0
        %482 = vmatpush1.bf16.xpose.msra.mxu0 0
        %483 = vmatprep.subr.bf16.mxu0 0
        %484 = vmatpush1.bf16.xpose.msra.mxu0 0
        %485 = vmatprep.subr.bf16.mxu0 0
        %486 = vmatpush1.bf16.xpose.msra.mxu0 0
        %487 = vmatprep.subr.bf16.mxu0 0
        %488 = vmatpush1.bf16.xpose.msra.mxu0 0
        %489 = vmatprep.subr.bf16.mxu0 0
        %490 = vmatpush1.bf16.xpose.msra.mxu0 0
        %491 = vmatprep.subr.bf16.mxu0 0
        %492 = vmatpush1.bf16.xpose.msra.mxu0 0
        %493 = vmatprep.mubr.bf16.mxu0 0
        %494 = vmatmul.mubr.bf16.gmra.mrb[0].mxu0 %v456
        %v495 = vpop.f32.mrb[0].mxu0
        %v496 = vadd.f32 0.0, %v495
        %v497 = vpop.f32.mrb[0].mxu0
        %v498 = vpop.f32.mrb[0].mxu0
        %v499 = vpop.f32.mrb[0].mxu0
        %500 = vdwg.mxu0
        %v501 = vsel %vm454, %v496, -inf
        %502 = vmax.xlane.f32.xlu0 %v501
        %v503 = vpop.xlane.xlu0 %502
        %v504 = vsub.f32 %v496, %v503
        %v505 = vmul.f32 %v504, 1.442695
        %v506 = vpow.pop %v505
        %v507 = vsel %vm454, %v506, 0.0
        %508 = vadd.xlane.f32.xlu0 %v507
        %v509 = vpop.xlane.xlu0 %508
        %v510 = vrcp.pop %v509
        %v511 = vmul.f32 %v506, %v510
        %v512 = vpack.c.bf16 %v511, %v511
        %513 = vrot.lane.b32.xlu0 %v450, 64
        %v514 = vpop.permute.xlu0 %513
        %v516 = vsel %vm454, %v512, 0
        %vm518 = vcmask 1043456
        %v520 = vsel %vm518, %v514, 0
        %522 = vmatprep.subr.bf16.mxu0 0
        %523 = vmatpush1.bf16.msra.mxu0 %v520
        %524 = vmatprep.subr.bf16.mxu0 0
        %525 = vmatpush1.bf16.msra.mxu0 0
        %526 = vmatprep.subr.bf16.mxu0 0
        %527 = vmatpush1.bf16.msra.mxu0 0
        %528 = vmatprep.subr.bf16.mxu0 0
        %529 = vmatpush1.bf16.msra.mxu0 0
        %530 = vmatprep.subr.bf16.mxu0 0
        %531 = vmatpush1.bf16.msra.mxu0 0
        %532 = vmatprep.subr.bf16.mxu0 0
        %533 = vmatpush1.bf16.msra.mxu0 0
        %534 = vmatprep.subr.bf16.mxu0 0
        %535 = vmatpush1.bf16.msra.mxu0 0
        %536 = vmatprep.subr.bf16.mxu0 0
        %537 = vmatpush1.bf16.msra.mxu0 0
        %538 = vmatprep.subr.bf16.mxu0 0
        %539 = vmatpush1.bf16.msra.mxu0 0
        %540 = vmatprep.subr.bf16.mxu0 0
        %541 = vmatpush1.bf16.msra.mxu0 0
        %542 = vmatprep.subr.bf16.mxu0 0
        %543 = vmatpush1.bf16.msra.mxu0 0
        %544 = vmatprep.subr.bf16.mxu0 0
        %545 = vmatpush1.bf16.msra.mxu0 0
        %546 = vmatprep.subr.bf16.mxu0 0
        %547 = vmatpush1.bf16.msra.mxu0 0
        %548 = vmatprep.subr.bf16.mxu0 0
        %549 = vmatpush1.bf16.msra.mxu0 0
        %550 = vmatprep.subr.bf16.mxu0 0
        %551 = vmatpush1.bf16.msra.mxu0 0
        %552 = vmatprep.subr.bf16.mxu0 0
        %553 = vmatpush1.bf16.msra.mxu0 0
        %554 = vmatprep.mubr.bf16.mxu0 0
        %555 = vmatmul.mubr.bf16.gmra.mrb[0].mxu0 %v516
        %v556 = vpop.f32.mrb[0].mxu0
        %v557 = vadd.f32 0.0, %v556
        %v558 = vpop.f32.mrb[0].mxu0
        %v559 = vpop.f32.mrb[0].mxu0
        %v560 = vpop.f32.mrb[0].mxu0
        %561 = vdwg.mxu0
        %563 = vrot.lane.b32.xlu0 %v449, 120
        %v564 = vpop.permute.xlu0 %563
        %565 = vrot.lane.b32.xlu0 %v450, 88
        %v566 = vpop.permute.xlu0 %565
        %v568 = vsel %vm454, %v564, 0
        %v571 = vsel %vm454, %v566, 0
        %573 = vmatprep.subr.bf16.mxu0 0
        %574 = vmatpush1.bf16.xpose.msra.mxu0 %v571
        %575 = vmatprep.subr.bf16.mxu0 0
        %576 = vmatpush1.bf16.xpose.msra.mxu0 0
        %577 = vmatprep.subr.bf16.mxu0 0
        %578 = vmatpush1.bf16.xpose.msra.mxu0 0
        %579 = vmatprep.subr.bf16.mxu0 0
        %580 = vmatpush1.bf16.xpose.msra.mxu0 0
        %581 = vmatprep.subr.bf16.mxu0 0
        %582 = vmatpush1.bf16.xpose.msra.mxu0 0
        %583 = vmatprep.subr.bf16.mxu0 0
        %584 = vmatpush1.bf16.xpose.msra.mxu0 0
        %585 = vmatprep.subr.bf16.mxu0 0
        %586 = vmatpush1.bf16.xpose.msra.mxu0 0
        %587 = vmatprep.subr.bf16.mxu0 0
        %588 = vmatpush1.bf16.xpose.msra.mxu0 0
        %589 = vmatprep.subr.bf16.mxu0 0
        %590 = vmatpush1.bf16.xpose.msra.mxu0 0
        %591 = vmatprep.subr.bf16.mxu0 0
        %592 = vmatpush1.bf16.xpose.msra.mxu0 0
        %593 = vmatprep.subr.bf16.mxu0 0
        %594 = vmatpush1.bf16.xpose.msra.mxu0 0
        %595 = vmatprep.subr.bf16.mxu0 0
        %596 = vmatpush1.bf16.xpose.msra.mxu0 0
        %597 = vmatprep.subr.bf16.mxu0 0
        %598 = vmatpush1.bf16.xpose.msra.mxu0 0
        %599 = vmatprep.subr.bf16.mxu0 0
        %600 = vmatpush1.bf16.xpose.msra.mxu0 0
        %601 = vmatprep.subr.bf16.mxu0 0
        %602 = vmatpush1.bf16.xpose.msra.mxu0 0
        %603 = vmatprep.subr.bf16.mxu0 0
        %604 = vmatpush1.bf16.xpose.msra.mxu0 0
        %605 = vmatprep.mubr.bf16.mxu0 0
        %606 = vmatmul.mubr.bf16.gmra.mrb[0].mxu0 %v568
        %v607 = vpop.f32.mrb[0].mxu0
        %v608 = vadd.f32 0.0, %v607
        %v609 = vpop.f32.mrb[0].mxu0
        %v610 = vpop.f32.mrb[0].mxu0
        %v611 = vpop.f32.mrb[0].mxu0
        %612 = vdwg.mxu0
        %v613 = vsel %vm454, %v608, -inf
        %614 = vmax.xlane.f32.xlu0 %v613
        %v615 = vpop.xlane.xlu0 %614
        %v616 = vsub.f32 %v608, %v615
        %v617 = vmul.f32 %v616, 1.442695
        %v618 = vpow.pop %v617
        %v619 = vsel %vm454, %v618, 0.0
        %620 = vadd.xlane.f32.xlu0 %v619
        %v621 = vpop.xlane.xlu0 %620
        %v622 = vrcp.pop %v621
        %v623 = vmul.f32 %v618, %v622
        %v624 = vpack.c.bf16 %v623, %v623
        %625 = vrot.lane.b32.xlu0 %v450, 56
        %v626 = vpop.permute.xlu0 %625
        %v628 = vsel %vm454, %v624, 0
        %v631 = vsel %vm518, %v626, 0
        %633 = vmatprep.subr.bf16.mxu0 0
        %634 = vmatpush1.bf16.msra.mxu0 %v631
        %635 = vmatprep.subr.bf16.mxu0 0
        %636 = vmatpush1.bf16.msra.mxu0 0
        %637 = vmatprep.subr.bf16.mxu0 0
        %638 = vmatpush1.bf16.msra.mxu0 0
        %639 = vmatprep.subr.bf16.mxu0 0
        %640 = vmatpush1.bf16.msra.mxu0 0
        %641 = vmatprep.subr.bf16.mxu0 0
        %642 = vmatpush1.bf16.msra.mxu0 0
        %643 = vmatprep.subr.bf16.mxu0 0
        %644 = vmatpush1.bf16.msra.mxu0 0
        %645 = vmatprep.subr.bf16.mxu0 0
        %646 = vmatpush1.bf16.msra.mxu0 0
        %647 = vmatprep.subr.bf16.mxu0 0
        %648 = vmatpush1.bf16.msra.mxu0 0
        %649 = vmatprep.subr.bf16.mxu0 0
        %650 = vmatpush1.bf16.msra.mxu0 0
        %651 = vmatprep.subr.bf16.mxu0 0
        %652 = vmatpush1.bf16.msra.mxu0 0
        %653 = vmatprep.subr.bf16.mxu0 0
        %654 = vmatpush1.bf16.msra.mxu0 0
        %655 = vmatprep.subr.bf16.mxu0 0
        %656 = vmatpush1.bf16.msra.mxu0 0
        %657 = vmatprep.subr.bf16.mxu0 0
        %658 = vmatpush1.bf16.msra.mxu0 0
        %659 = vmatprep.subr.bf16.mxu0 0
        %660 = vmatpush1.bf16.msra.mxu0 0
        %661 = vmatprep.subr.bf16.mxu0 0
        %662 = vmatpush1.bf16.msra.mxu0 0
        %663 = vmatprep.subr.bf16.mxu0 0
        %664 = vmatpush1.bf16.msra.mxu0 0
        %665 = vmatprep.mubr.bf16.mxu0 0
        %666 = vmatmul.mubr.bf16.gmra.mrb[0].mxu0 %v628
        %v667 = vpop.f32.mrb[0].mxu0
        %v668 = vadd.f32 0.0, %v667
        %v669 = vpop.f32.mrb[0].mxu0
        %v670 = vpop.f32.mrb[0].mxu0
        %v671 = vpop.f32.mrb[0].mxu0
        %672 = vdwg.mxu0
        %673 = vrot.lane.b32.xlu0 %v449, 112
        %v674 = vpop.permute.xlu0 %673
        %675 = vrot.lane.b32.xlu0 %v450, 80
        %v676 = vpop.permute.xlu0 %675
        %v678 = vsel %vm454, %v674, 0
        %v681 = vsel %vm454, %v676, 0
        %683 = vmatprep.subr.bf16.mxu0 0
        %684 = vmatpush1.bf16.xpose.msra.mxu0 %v681
        %685 = vmatprep.subr.bf16.mxu0 0
        %686 = vmatpush1.bf16.xpose.msra.mxu0 0
        %687 = vmatprep.subr.bf16.mxu0 0
        %688 = vmatpush1.bf16.xpose.msra.mxu0 0
        %689 = vmatprep.subr.bf16.mxu0 0
        %690 = vmatpush1.bf16.xpose.msra.mxu0 0
        %691 = vmatprep.subr.bf16.mxu0 0
        %692 = vmatpush1.bf16.xpose.msra.mxu0 0
        %693 = vmatprep.subr.bf16.mxu0 0
        %694 = vmatpush1.bf16.xpose.msra.mxu0 0
        %695 = vmatprep.subr.bf16.mxu0 0
        %696 = vmatpush1.bf16.xpose.msra.mxu0 0
        %697 = vmatprep.subr.bf16.mxu0 0
        %698 = vmatpush1.bf16.xpose.msra.mxu0 0
        %699 = vmatprep.subr.bf16.mxu0 0
        %700 = vmatpush1.bf16.xpose.msra.mxu0 0
        %701 = vmatprep.subr.bf16.mxu0 0
        %702 = vmatpush1.bf16.xpose.msra.mxu0 0
        %703 = vmatprep.subr.bf16.mxu0 0
        %704 = vmatpush1.bf16.xpose.msra.mxu0 0
        %705 = vmatprep.subr.bf16.mxu0 0
        %706 = vmatpush1.bf16.xpose.msra.mxu0 0
        %707 = vmatprep.subr.bf16.mxu0 0
        %708 = vmatpush1.bf16.xpose.msra.mxu0 0
        %709 = vmatprep.subr.bf16.mxu0 0
        %710 = vmatpush1.bf16.xpose.msra.mxu0 0
        %711 = vmatprep.subr.bf16.mxu0 0
        %712 = vmatpush1.bf16.xpose.msra.mxu0 0
        %713 = vmatprep.subr.bf16.mxu0 0
        %714 = vmatpush1.bf16.xpose.msra.mxu0 0
        %715 = vmatprep.mubr.bf16.mxu0 0
        %716 = vmatmul.mubr.bf16.gmra.mrb[0].mxu0 %v678
        %v717 = vpop.f32.mrb[0].mxu0
        %v718 = vadd.f32 0.0, %v717
        %v719 = vpop.f32.mrb[0].mxu0
        %v720 = vpop.f32.mrb[0].mxu0
        %v721 = vpop.f32.mrb[0].mxu0
        %722 = vdwg.mxu0
        %v723 = vsel %vm454, %v718, -inf
        %724 = vmax.xlane.f32.xlu0 %v723
        %v725 = vpop.xlane.xlu0 %724
        %v726 = vsub.f32 %v718, %v725
        %v727 = vmul.f32 %v726, 1.442695
        %v728 = vpow.pop %v727
        %v729 = vsel %vm454, %v728, 0.0
        %730 = vadd.xlane.f32.xlu0 %v729
        %v731 = vpop.xlane.xlu0 %730
        %v732 = vrcp.pop %v731
        %v733 = vmul.f32 %v728, %v732
        %v734 = vpack.c.bf16 %v733, %v733
        %735 = vrot.lane.b32.xlu0 %v450, 48
        %v736 = vpop.permute.xlu0 %735
        %v738 = vsel %vm454, %v734, 0
        %v741 = vsel %vm518, %v736, 0
        %743 = vmatprep.subr.bf16.mxu0 0
        %744 = vmatpush1.bf16.msra.mxu0 %v741
        %745 = vmatprep.subr.bf16.mxu0 0
        %746 = vmatpush1.bf16.msra.mxu0 0
        %747 = vmatprep.subr.bf16.mxu0 0
        %748 = vmatpush1.bf16.msra.mxu0 0
        %749 = vmatprep.subr.bf16.mxu0 0
        %750 = vmatpush1.bf16.msra.mxu0 0
        %751 = vmatprep.subr.bf16.mxu0 0
        %752 = vmatpush1.bf16.msra.mxu0 0
        %753 = vmatprep.subr.bf16.mxu0 0
        %754 = vmatpush1.bf16.msra.mxu0 0
        %755 = vmatprep.subr.bf16.mxu0 0
        %756 = vmatpush1.bf16.msra.mxu0 0
        %757 = vmatprep.subr.bf16.mxu0 0
        %758 = vmatpush1.bf16.msra.mxu0 0
        %759 = vmatprep.subr.bf16.mxu0 0
        %760 = vmatpush1.bf16.msra.mxu0 0
        %761 = vmatprep.subr.bf16.mxu0 0
        %762 = vmatpush1.bf16.msra.mxu0 0
        %763 = vmatprep.subr.bf16.mxu0 0
        %764 = vmatpush1.bf16.msra.mxu0 0
        %765 = vmatprep.subr.bf16.mxu0 0
        %766 = vmatpush1.bf16.msra.mxu0 0
        %767 = vmatprep.subr.bf16.mxu0 0
        %768 = vmatpush1.bf16.msra.mxu0 0
        %769 = vmatprep.subr.bf16.mxu0 0
        %770 = vmatpush1.bf16.msra.mxu0 0
        %771 = vmatprep.subr.bf16.mxu0 0
        %772 = vmatpush1.bf16.msra.mxu0 0
        %773 = vmatprep.subr.bf16.mxu0 0
        %774 = vmatpush1.bf16.msra.mxu0 0
        %775 = vmatprep.mubr.bf16.mxu0 0
        %776 = vmatmul.mubr.bf16.gmra.mrb[0].mxu0 %v738
        %v777 = vpop.f32.mrb[0].mxu0
        %v778 = vadd.f32 0.0, %v777
        %v779 = vpop.f32.mrb[0].mxu0
        %v780 = vpop.f32.mrb[0].mxu0
        %v781 = vpop.f32.mrb[0].mxu0
        %782 = vdwg.mxu0
        %783 = vrot.lane.b32.xlu0 %v449, 104
        %v784 = vpop.permute.xlu0 %783
        %785 = vrot.lane.b32.xlu0 %v450, 72
        %v786 = vpop.permute.xlu0 %785
        %v788 = vsel %vm454, %v784, 0
        %v791 = vsel %vm454, %v786, 0
        %793 = vmatprep.subr.bf16.mxu0 0
        %794 = vmatpush1.bf16.xpose.msra.mxu0 %v791
        %795 = vmatprep.subr.bf16.mxu0 0
        %796 = vmatpush1.bf16.xpose.msra.mxu0 0
        %797 = vmatprep.subr.bf16.mxu0 0
        %798 = vmatpush1.bf16.xpose.msra.mxu0 0
        %799 = vmatprep.subr.bf16.mxu0 0
        %800 = vmatpush1.bf16.xpose.msra.mxu0 0
        %801 = vmatprep.subr.bf16.mxu0 0
        %802 = vmatpush1.bf16.xpose.msra.mxu0 0
        %803 = vmatprep.subr.bf16.mxu0 0
        %804 = vmatpush1.bf16.xpose.msra.mxu0 0
        %805 = vmatprep.subr.bf16.mxu0 0
        %806 = vmatpush1.bf16.xpose.msra.mxu0 0
        %807 = vmatprep.subr.bf16.mxu0 0
        %808 = vmatpush1.bf16.xpose.msra.mxu0 0
        %809 = vmatprep.subr.bf16.mxu0 0
        %810 = vmatpush1.bf16.xpose.msra.mxu0 0
        %811 = vmatprep.subr.bf16.mxu0 0
        %812 = vmatpush1.bf16.xpose.msra.mxu0 0
        %813 = vmatprep.subr.bf16.mxu0 0
        %814 = vmatpush1.bf16.xpose.msra.mxu0 0
        %815 = vmatprep.subr.bf16.mxu0 0
        %816 = vmatpush1.bf16.xpose.msra.mxu0 0
        %817 = vmatprep.subr.bf16.mxu0 0
        %818 = vmatpush1.bf16.xpose.msra.mxu0 0
        %819 = vmatprep.subr.bf16.mxu0 0
        %820 = vmatpush1.bf16.xpose.msra.mxu0 0
        %821 = vmatprep.subr.bf16.mxu0 0
        %822 = vmatpush1.bf16.xpose.msra.mxu0 0
        %823 = vmatprep.subr.bf16.mxu0 0
        %824 = vmatpush1.bf16.xpose.msra.mxu0 0
        %825 = vmatprep.mubr.bf16.mxu0 0
        %826 = vmatmul.mubr.bf16.gmra.mrb[0].mxu0 %v788
        %v827 = vpop.f32.mrb[0].mxu0
        %v828 = vadd.f32 0.0, %v827
        %v829 = vpop.f32.mrb[0].mxu0
        %v830 = vpop.f32.mrb[0].mxu0
        %v831 = vpop.f32.mrb[0].mxu0
        %832 = vdwg.mxu0
        %v833 = vsel %vm454, %v828, -inf
        %834 = vmax.xlane.f32.xlu0 %v833
        %v835 = vpop.xlane.xlu0 %834
        %v836 = vsub.f32 %v828, %v835
        %v837 = vmul.f32 %v836, 1.442695
        %v838 = vpow.pop %v837
        %v839 = vsel %vm454, %v838, 0.0
        %840 = vadd.xlane.f32.xlu0 %v839
        %v841 = vpop.xlane.xlu0 %840
        %v842 = vrcp.pop %v841
        %v843 = vmul.f32 %v838, %v842
        %v844 = vpack.c.bf16 %v843, %v843
        %845 = vrot.lane.b32.xlu0 %v450, 40
        %v846 = vpop.permute.xlu0 %845
        %v848 = vsel %vm454, %v844, 0
        %v851 = vsel %vm518, %v846, 0
        %853 = vmatprep.subr.bf16.mxu0 0
        %854 = vmatpush1.bf16.msra.mxu0 %v851
        %855 = vmatprep.subr.bf16.mxu0 0
        %856 = vmatpush1.bf16.msra.mxu0 0
        %857 = vmatprep.subr.bf16.mxu0 0
        %858 = vmatpush1.bf16.msra.mxu0 0
        %859 = vmatprep.subr.bf16.mxu0 0
        %860 = vmatpush1.bf16.msra.mxu0 0
        %861 = vmatprep.subr.bf16.mxu0 0
        %862 = vmatpush1.bf16.msra.mxu0 0
        %863 = vmatprep.subr.bf16.mxu0 0
        %864 = vmatpush1.bf16.msra.mxu0 0
        %865 = vmatprep.subr.bf16.mxu0 0
        %866 = vmatpush1.bf16.msra.mxu0 0
        %867 = vmatprep.subr.bf16.mxu0 0
        %868 = vmatpush1.bf16.msra.mxu0 0
        %869 = vmatprep.subr.bf16.mxu0 0
        %870 = vmatpush1.bf16.msra.mxu0 0
        %871 = vmatprep.subr.bf16.mxu0 0
        %872 = vmatpush1.bf16.msra.mxu0 0
        %873 = vmatprep.subr.bf16.mxu0 0
        %874 = vmatpush1.bf16.msra.mxu0 0
        %875 = vmatprep.subr.bf16.mxu0 0
        %876 = vmatpush1.bf16.msra.mxu0 0
        %877 = vmatprep.subr.bf16.mxu0 0
        %878 = vmatpush1.bf16.msra.mxu0 0
        %879 = vmatprep.subr.bf16.mxu0 0
        %880 = vmatpush1.bf16.msra.mxu0 0
        %881 = vmatprep.subr.bf16.mxu0 0
        %882 = vmatpush1.bf16.msra.mxu0 0
        %883 = vmatprep.subr.bf16.mxu0 0
        %884 = vmatpush1.bf16.msra.mxu0 0
        %885 = vmatprep.mubr.bf16.mxu0 0
        %886 = vmatmul.mubr.bf16.gmra.mrb[0].mxu0 %v848
        %v887 = vpop.f32.mrb[0].mxu0
        %v888 = vadd.f32 0.0, %v887
        %v889 = vpop.f32.mrb[0].mxu0
        %v890 = vpop.f32.mrb[0].mxu0
        %v891 = vpop.f32.mrb[0].mxu0
        %892 = vdwg.mxu0
        %894 = vrot.lane.b32.xlu0 %v668, 8
        %v895 = vpop.permute.xlu0 %894
        %898 = vrot.lane.b32.xlu0 %v778, 16
        %v899 = vpop.permute.xlu0 %898
        %902 = vrot.lane.b32.xlu0 %v888, 24
        %v903 = vpop.permute.xlu0 %902
        %v905 = vsel %vm454, %v557, %v895
        %vm906 = vcmask 130048
        %v907 = vsel %vm906, %v905, %v899
        %vm908 = vcmask 195584
        %v909 = vsel %vm908, %v907, %v903
        %v910 = vpack.c.bf16 %v909, %v909
        %v911 = vld [vmem:[%s4] sm:$0xf]
        %v912 = vld [vmem:[%s4 + $0x4] sm:$0xf]
        %v913 = vld [vmem:[%s4 + $0x8] sm:$0xf]
        %v914 = vld [vmem:[%s4 + $0xc] sm:$0xf]
        %v915 = vld [vmem:[%s5] sm:$0x1]
        %v917 = vlaneseq
        %v918 = vshrl.u32 %v917, 7
        %v919 = vsub.s32 0, %v918
        %v920 = vrot.slane %v915, %v919
        %v926 = vunpack.c.l.b16 %v911
        %v927 = vunpack.c.l.b16 %v912
        %v928 = vunpack.c.l.b16 %v913
        %v929 = vunpack.c.l.b16 %v914
        %v930 = vpack.c.b16 %v927, %v926
        %v931 = vpack.c.b16 %v929, %v928
        %v935 = vsel %vm359, %v910, 0
        %937 = vmatprep.subr.bf16.mxu0 0
        %938 = vmatpush1.bf16.msra.mxu0 %v930
        %939 = vmatprep.subr.bf16.mxu0 0
        %940 = vmatpush1.bf16.msra.mxu0 %v931
        %941 = vmatprep.subr.bf16.mxu0 0
        %942 = vmatpush1.bf16.msra.mxu0 0
        %943 = vmatprep.subr.bf16.mxu0 0
        %944 = vmatpush1.bf16.msra.mxu0 0
        %945 = vmatprep.subr.bf16.mxu0 0
        %946 = vmatpush1.bf16.msra.mxu0 0
        %947 = vmatprep.subr.bf16.mxu0 0
        %948 = vmatpush1.bf16.msra.mxu0 0
        %949 = vmatprep.subr.bf16.mxu0 0
        %950 = vmatpush1.bf16.msra.mxu0 0
        %951 = vmatprep.subr.bf16.mxu0 0
        %952 = vmatpush1.bf16.msra.mxu0 0
        %953 = vmatprep.subr.bf16.mxu0 0
        %954 = vmatpush1.bf16.msra.mxu0 0
        %955 = vmatprep.subr.bf16.mxu0 0
        %956 = vmatpush1.bf16.msra.mxu0 0
        %957 = vmatprep.subr.bf16.mxu0 0
        %958 = vmatpush1.bf16.msra.mxu0 0
        %959 = vmatprep.subr.bf16.mxu0 0
        %960 = vmatpush1.bf16.msra.mxu0 0
        %961 = vmatprep.subr.bf16.mxu0 0
        %962 = vmatpush1.bf16.msra.mxu0 0
        %963 = vmatprep.subr.bf16.mxu0 0
        %964 = vmatpush1.bf16.msra.mxu0 0
        %965 = vmatprep.subr.bf16.mxu0 0
        %966 = vmatpush1.bf16.msra.mxu0 0
        %967 = vmatprep.subr.bf16.mxu0 0
        %968 = vmatpush1.bf16.msra.mxu0 0
        %969 = vmatprep.mubr.bf16.mxu0 0
        %970 = vmatmul.mubr.bf16.gmra.mrb[0].mxu0 %v935
        %v971 = vpop.f32.mrb[0].mxu0
        %v972 = vadd.f32 %v920, %v971
        %v973 = vpop.f32.mrb[0].mxu0
        %v974 = vpop.f32.mrb[0].mxu0
        %v975 = vpop.f32.mrb[0].mxu0
        %976 = vdwg.mxu0
        %v977 = vadd.f32 %v356, %v972
        %v978 = vsel %vm359, %v977, 0.0
        %979 = vadd.xlane.f32.xlu0 %v978
        %v980 = vpop.xlane.xlu0 %979
        %v981 = vmul.f32 %v980, %v363
        %v982 = vsub.f32 %v977, %v981
        %v983 = vmul.f32 %v982, %v982
        %v984 = vsel %vm359, %v983, 0.0
        %985 = vadd.xlane.f32.xlu0 %v984
        %v986 = vpop.xlane.xlu0 %985
        %v987 = vmul.f32 %v986, %v363
        %v988 = vadd.f32 %v987, 1e-05
        %v989 = vrsqrt.pop %v988
        %v990 = vmul.f32 %v982, %v989
        %v991 = vmul.f32 %v990, %v378
        %v992 = vadd.f32 %v991, %v385
        %v993 = vpack.c.bf16 %v992, %v992
        %v994 = vld [vmem:[%s6] sm:$0xf]
        %v995 = vld [vmem:[%s6 + $0x4] sm:$0xf]
        %v996 = vld [vmem:[%s6 + $0x8] sm:$0xf]
        %v997 = vld [vmem:[%s6 + $0xc] sm:$0xf]
        %v998 = vld [vmem:[%s7] sm:$0x1]
        %v1000 = vlaneseq
        %v1001 = vshrl.u32 %v1000, 7
        %v1002 = vsub.s32 0, %v1001
        %v1003 = vrot.slane %v998, %v1002
        %v1009 = vunpack.c.l.b16 %v994
        %v1010 = vunpack.c.l.b16 %v995
        %v1011 = vunpack.c.l.b16 %v996
        %v1012 = vunpack.c.l.b16 %v997
        %v1013 = vpack.c.b16 %v1010, %v1009
        %v1014 = vpack.c.b16 %v1012, %v1011
        %v1018 = vsel %vm359, %v993, 0
        %1020 = vmatprep.subr.bf16.mxu0 0
        %1021 = vmatpush1.bf16.msra.mxu0 %v1013
        %1022 = vmatprep.subr.bf16.mxu0 0
        %1023 = vmatpush1.bf16.msra.mxu0 %v1014
        %1024 = vmatprep.subr.bf16.mxu0 0
        %1025 = vmatpush1.bf16.msra.mxu0 0
        %1026 = vmatprep.subr.bf16.mxu0 0
        %1027 = vmatpush1.bf16.msra.mxu0 0
        %1028 = vmatprep.subr.bf16.mxu0 0
        %1029 = vmatpush1.bf16.msra.mxu0 0
        %1030 = vmatprep.subr.bf16.mxu0 0
        %1031 = vmatpush1.bf16.msra.mxu0 0
        %1032 = vmatprep.subr.bf16.mxu0 0
        %1033 = vmatpush1.bf16.msra.mxu0 0
        %1034 = vmatprep.subr.bf16.mxu0 0
        %1035 = vmatpush1.bf16.msra.mxu0 0
        %1036 = vmatprep.subr.bf16.mxu0 0
        %1037 = vmatpush1.bf16.msra.mxu0 0
        %1038 = vmatprep.subr.bf16.mxu0 0
        %1039 = vmatpush1.bf16.msra.mxu0 0
        %1040 = vmatprep.subr.bf16.mxu0 0
        %1041 = vmatpush1.bf16.msra.mxu0 0
        %1042 = vmatprep.subr.bf16.mxu0 0
        %1043 = vmatpush1.bf16.msra.mxu0 0
        %1044 = vmatprep.subr.bf16.mxu0 0
        %1045 = vmatpush1.bf16.msra.mxu0 0
        %1046 = vmatprep.subr.bf16.mxu0 0
        %1047 = vmatpush1.bf16.msra.mxu0 0
        %1048 = vmatprep.subr.bf16.mxu0 0
        %1049 = vmatpush1.bf16.msra.mxu0 0
        %1050 = vmatprep.subr.bf16.mxu0 0
        %1051 = vmatpush1.bf16.msra.mxu0 0
        %1052 = vmatprep.mubr.bf16.mxu0 0
        %1053 = vmatmul.mubr.bf16.gmra.mrb[0].mxu0 %v1018
        %v1054 = vpop.f32.mrb[0].mxu0
        %v1055 = vadd.f32 %v1003, %v1054
        %v1056 = vpop.f32.mrb[0].mxu0
        %v1057 = vpop.f32.mrb[0].mxu0
        %v1058 = vpop.f32.mrb[0].mxu0
        %1059 = vdwg.mxu0
        %v1060 = vmul.f32 %v1055, 0.5
        %v1061 = vmul.f32 %v1055, 0.70710677
        %v1062 = verf.f32.pop %v1061
        %v1063 = vadd.f32 %v1062, 1.0
        %v1064 = vmul.f32 %v1060, %v1063
        %v1065 = vpack.c.bf16 %v1064, %v1064
        %v1066 = vld [vmem:[%s8] sm:$0xf]
        %v1067 = vld [vmem:[%s8 + $0x4] sm:$0xf]
        %v1068 = vld [vmem:[%s8 + $0x8] sm:$0xf]
        %v1069 = vld [vmem:[%s8 + $0xc] sm:$0xf]
        %v1070 = vld [vmem:[%s8 + $0x10] sm:$0xf]
        %v1071 = vld [vmem:[%s8 + $0x14] sm:$0xf]
        %v1072 = vld [vmem:[%s8 + $0x18] sm:$0xf]
        %v1073 = vld [vmem:[%s8 + $0x1c] sm:$0xf]
        %v1074 = vld [vmem:[%s8 + $0x20] sm:$0xf]
        %v1075 = vld [vmem:[%s8 + $0x24] sm:$0xf]
        %v1076 = vld [vmem:[%s8 + $0x28] sm:$0xf]
        %v1077 = vld [vmem:[%s8 + $0x2c] sm:$0xf]
        %v1078 = vld [vmem:[%s8 + $0x30] sm:$0xf]
        %v1079 = vld [vmem:[%s8 + $0x34] sm:$0xf]
        %v1080 = vld [vmem:[%s8 + $0x38] sm:$0xf]
        %v1081 = vld [vmem:[%s8 + $0x3c] sm:$0xf]
        %v1082 = vld [vmem:[%s9] sm:$0x1]
        %v1084 = vlaneseq
        %v1085 = vshrl.u32 %v1084, 7
        %v1086 = vsub.s32 0, %v1085
        %v1087 = vrot.slane %v1082, %v1086
        %v1105 = vunpack.c.l.b16 %v1066
        %v1106 = vunpack.c.l.b16 %v1067
        %v1107 = vunpack.c.l.b16 %v1068
        %v1108 = vunpack.c.l.b16 %v1069
        %v1109 = vunpack.c.l.b16 %v1070
        %v1110 = vunpack.c.l.b16 %v1071
        %v1111 = vunpack.c.l.b16 %v1072
        %v1112 = vunpack.c.l.b16 %v1073
        %v1113 = vunpack.c.l.b16 %v1074
        %v1114 = vunpack.c.l.b16 %v1075
        %v1115 = vunpack.c.l.b16 %v1076
        %v1116 = vunpack.c.l.b16 %v1077
        %v1117 = vunpack.c.l.b16 %v1078
        %v1118 = vunpack.c.l.b16 %v1079
        %v1119 = vunpack.c.l.b16 %v1080
        %v1120 = vunpack.c.l.b16 %v1081
        %v1121 = vpack.c.b16 %v1106, %v1105
        %v1122 = vpack.c.b16 %v1108, %v1107
        %v1123 = vpack.c.b16 %v1110, %v1109
        %v1124 = vpack.c.b16 %v1112, %v1111
        %v1125 = vpack.c.b16 %v1114, %v1113
        %v1126 = vpack.c.b16 %v1116, %v1115
        %v1127 = vpack.c.b16 %v1118, %v1117
        %v1128 = vpack.c.b16 %v1120, %v1119
        %1137 = vmatprep.subr.bf16.mxu0 0
        %1138 = vmatpush1.bf16.msra.mxu0 %v1121
        %1139 = vmatprep.subr.bf16.mxu0 0
        %1140 = vmatpush1.bf16.msra.mxu0 %v1122
        %1141 = vmatprep.subr.bf16.mxu0 0
        %1142 = vmatpush1.bf16.msra.mxu0 %v1123
        %1143 = vmatprep.subr.bf16.mxu0 0
        %1144 = vmatpush1.bf16.msra.mxu0 %v1124
        %1145 = vmatprep.subr.bf16.mxu0 0
        %1146 = vmatpush1.bf16.msra.mxu0 %v1125
        %1147 = vmatprep.subr.bf16.mxu0 0
        %1148 = vmatpush1.bf16.msra.mxu0 %v1126
        %1149 = vmatprep.subr.bf16.mxu0 0
        %1150 = vmatpush1.bf16.msra.mxu0 %v1127
        %1151 = vmatprep.subr.bf16.mxu0 0
        %1152 = vmatpush1.bf16.msra.mxu0 %v1128
        %1153 = vmatprep.subr.bf16.mxu0 0
        %1154 = vmatpush1.bf16.msra.mxu0 0
        %1155 = vmatprep.subr.bf16.mxu0 0
        %1156 = vmatpush1.bf16.msra.mxu0 0
        %1157 = vmatprep.subr.bf16.mxu0 0
        %1158 = vmatpush1.bf16.msra.mxu0 0
        %1159 = vmatprep.subr.bf16.mxu0 0
        %1160 = vmatpush1.bf16.msra.mxu0 0
        %1161 = vmatprep.subr.bf16.mxu0 0
        %1162 = vmatpush1.bf16.msra.mxu0 0
        %1163 = vmatprep.subr.bf16.mxu0 0
        %1164 = vmatpush1.bf16.msra.mxu0 0
        %1165 = vmatprep.subr.bf16.mxu0 0
        %1166 = vmatpush1.bf16.msra.mxu0 0
        %1167 = vmatprep.subr.bf16.mxu0 0
        %1168 = vmatpush1.bf16.msra.mxu0 0
        %1169 = vmatprep.mubr.bf16.mxu0 0
        %1170 = vmatmul.mubr.bf16.gmra.mrb[0].mxu0 %v1065
        %v1171 = vpop.f32.mrb[0].mxu0
        %v1172 = vadd.f32 %v1087, %v1171
        %v1173 = vpop.f32.mrb[0].mxu0
        %v1174 = vpop.f32.mrb[0].mxu0
        %v1175 = vpop.f32.mrb[0].mxu0
        %1176 = vdwg.mxu0
        %v1177 = vmul.f32 %v1172, 0.5
        %v1178 = vmul.f32 %v1172, 0.70710677
        %v1179 = verf.f32.pop %v1178
        %v1180 = vadd.f32 %v1179, 1.0
        %v1181 = vmul.f32 %v1177, %v1180
        %v1182 = vadd.f32 %v977, %v1181
        %1183 = vst.msk [vmem:[%s350] sm:$0xff] %vm359, %v1182
        %s1184 = sand.u32 %s247, 1
        %s1185 = scalar_lea.sflag [#allocation3], %s1184
        %s1186 = sand.u32 %s247, 1
        %s1187 = smul.addr %s1186, 8
        %s1188 = scalar_lea.vmem [#allocation2], %s1187
        // Predicated region
        $region61: #{tpu_custom_call.1} parent=59 // pred_check
          %p1189 = pneg %p257
        $region62: #{tpu_custom_call.1} parent=59 // pred_check_branch
          %1191 = sbr.rel (%p1189) target = $region64
        $region63: #{tpu_custom_call.1} parent=59 // pred_region
          %s1193 = ssub.s32 128, 128
          %1194 = vsyncadd %s1185, %s1193
          %s1195 = smul.addr %s24, 128
          %s1196 = scalar_lea.hbm %s10, %s1195
          %s1198 = sshll.u32 %s1188, 4
          %s1199 = int_to_ptr.vmem [resolvable:$true] %s1198
          %1201 = dma.vmem_to_hbm [thread:$0]  %s1199, 128, %s1196, %s1185
        $region64: #{tpu_custom_call.1} parent=59 // pred_fallthru
          _
      $region60: #{tpu_custom_call.1} parent=5 // pred_fallthru
        _
      %p1202 = scmp.le.s32.totalorder 2, %s19
      // Predicated region
      $region65: #{tpu_custom_call.1} parent=5 // pred_check
        %p1203 = pneg %p1202
      $region66: #{tpu_custom_call.1} parent=5 // pred_check_branch
        %1205 = sbr.rel (%p1203) target = $region68
      $region67: #{tpu_custom_call.1} parent=5 // pred_region
        %s1206 = ssub.s32 %s19, 2
        // Predicated region
        $region69: #{tpu_custom_call.1} parent=67 // pred_check
          %p1207 = pneg %p263
        $region70: #{tpu_custom_call.1} parent=67 // pred_check_branch
          %1209 = sbr.rel (%p1207) target = $region72
        $region71: #{tpu_custom_call.1} parent=67 // pred_region
          %s1210 = sand.u32 %s248, 1
          %s1211 = scalar_lea.sflag [#allocation3], %s1210
          %s1212 = sand.u32 %s248, 1
          %s1213 = smul.addr %s1212, 8
          %s1214 = scalar_lea.vmem [#allocation2], %s1213
          %1215 = dma.done %s1211, 128
        $region72: #{tpu_custom_call.1} parent=67 // pred_fallthru
          _
      $region68: #{tpu_custom_call.1} parent=5 // pred_fallthru
        _
    $region6: #{tpu_custom_call.1} parent=1 // loop_footer
      %s23 = sadd.s32 1, %s19
    $region7: #{tpu_custom_call.1} parent=1 // loop_footer_branch
      %18 = sbr.rel target = $region3
    $region8: #{tpu_custom_call.1} parent=1 // loop_exit
      _
    %1216 = vsyncpa [#allocation3], 1
    %s1217 = scalar_lea.sflag [#allocation3], 1
    %1218 = vsyncpa %s1217, 1

</llo_original>
